<compile_context>
chip_gen: v5e
topology: v5e:2x2
jax: 0.10.0
libtpu: 0.0.40
codegen_flags: <defaults>
</compile_context>

<pallas_src>
import jax
import jax.numpy as jnp
from jax.experimental import pallas as pl
from jax.experimental.pallas import tpu as pltpu

BN_EPS = 1e-5


# ---------------------------------------------------------------------------
# Kernel: one batch tile through the whole (BN-folded) MLP.
# ---------------------------------------------------------------------------
def encoder_kernel(x_ref, w1_ref, b1_ref, w2_ref, b2_ref, w3_ref, b3_ref, out_ref):
    # Layer 1: Linear(784p -> 512) [BN folded] + ReLU   (Dropout = identity)
    h = jnp.dot(x_ref[...], w1_ref[...], preferred_element_type=jnp.float32)
    h = jnp.maximum(h + b1_ref[...], 0.0).astype(jnp.bfloat16)

    # Layer 2: Linear(512 -> 128) [BN folded] + ReLU    (Dropout = identity)
    h = jnp.dot(h, w2_ref[...], preferred_element_type=jnp.float32)
    h = jnp.maximum(h + b2_ref[...], 0.0).astype(jnp.bfloat16)

    # Layer 3: Linear(128 -> 128p) [BN folded] + ReLU
    h = jnp.dot(h, w3_ref[...], preferred_element_type=jnp.float32)
    out_ref[...] = jnp.maximum(h + b3_ref[...], 0.0).astype(out_ref.dtype)


# ---------------------------------------------------------------------------
# Wrapper: BN folding, padding to lane-dense shapes, batch-tiled pallas_call.
# ---------------------------------------------------------------------------
def _round_up(n, m):
    return ((n + m - 1) // m) * m


def _pad_to(a, shape):
    return jnp.pad(a, [(0, t - s) for s, t in zip(a.shape, shape)])


def _fold_bn(w, b, g, be, m, v):
    """Fold eval-mode BatchNorm1d + Linear bias into (W', b')."""
    scale = g * jax.lax.rsqrt(v + BN_EPS)          # (1, out)
    return w * scale, (b - m) * scale + be


@jax.jit
def encoder_forward(x, params):
    """x: (B, input_size) float32.  params: dict of per-layer tensors."""
    B, K = x.shape
    latent_dim = params["w3"].shape[1]

    # Padded (lane-dense) dimensions.
    K_pad = _round_up(K, 128)                        # 784 -> 896
    H1 = _round_up(params["w1"].shape[1], 128)       # 500 -> 512
    H2 = _round_up(params["w2"].shape[1], 128)       # 100 -> 128
    H3 = _round_up(latent_dim, 128)                  #  20 -> 128

    # Batch tiling: TB rows per grid step (multiple of 8 sublanes, cap 256).
    TB = min(256, _round_up(B, 8))
    B_pad = _round_up(B, TB)

    # Fold BN + bias into weights, then zero-pad and cast weights to bf16.
    w1, b1 = _fold_bn(params["w1"], params["b1"], params["g1"],
                      params["be1"], params["m1"], params["v1"])
    w2, b2 = _fold_bn(params["w2"], params["b2"], params["g2"],
                      params["be2"], params["m2"], params["v2"])
    w3, b3 = _fold_bn(params["w3"], params["b3"], params["g3"],
                      params["be3"], params["m3"], params["v3"])

    w1 = _pad_to(w1, (K_pad, H1)).astype(jnp.bfloat16)
    w2 = _pad_to(w2, (H1, H2)).astype(jnp.bfloat16)
    w3 = _pad_to(w3, (H2, H3)).astype(jnp.bfloat16)
    b1 = _pad_to(b1, (1, H1)).astype(jnp.float32)
    b2 = _pad_to(b2, (1, H2)).astype(jnp.float32)
    b3 = _pad_to(b3, (1, H3)).astype(jnp.float32)

    xp = _pad_to(x, (B_pad, K_pad)).astype(jnp.bfloat16)

    def tiled(shape):      # batch-tiled operand / output
        return pl.BlockSpec(shape, lambda i: (i, 0))

    def resident(shape):   # weights/biases: same block every step -> VMEM-resident
        return pl.BlockSpec(shape, lambda i: (0, 0))

    out = pl.pallas_call(
        encoder_kernel,
        out_shape=jax.ShapeDtypeStruct((B_pad, H3), jnp.float32),
        grid_spec=pltpu.PrefetchScalarGridSpec(
            num_scalar_prefetch=0,
            grid=(B_pad // TB,),
            in_specs=[
                tiled((TB, K_pad)),
                resident((K_pad, H1)), resident((1, H1)),
                resident((H1, H2)),    resident((1, H2)),
                resident((H2, H3)),    resident((1, H3)),
            ],
            out_specs=tiled((TB, H3)),
        ),
        compiler_params=pltpu.CompilerParams(
            dimension_semantics=("parallel",),
        ),
    )(xp, w1, b1, w2, b2, w3, b3)

    return out[:B, :latent_dim]


# ---------------------------------------------------------------------------
# Synthetic parameters + pure-JAX f32 reference of the original module.
# ---------------------------------------------------------------------------
def init_params(key, input_size=28 * 28, latent_dim=20):
    """Deterministic synthetic parameters matching the PyTorch module shapes.

    Linear weights use PyTorch's default U(-1/sqrt(fan_in), 1/sqrt(fan_in))
    init and are stored pre-transposed as (in_features, out_features).
    BatchNorm params are randomized so the folded scale/shift is exercised.
    """
    dims = [input_size, 500, 100, latent_dim]
    params = {}
    for li in range(3):
        fan_in, fan_out = dims[li], dims[li + 1]
        key, kw, kb, kg, kbe, km, kv = jax.random.split(key, 7)
        bound = 1.0 / jnp.sqrt(fan_in)
        params[f"w{li+1}"] = jax.random.uniform(
            kw, (fan_in, fan_out), jnp.float32, -bound, bound)
        params[f"b{li+1}"] = jax.random.uniform(
            kb, (1, fan_out), jnp.float32, -bound, bound)
        params[f"g{li+1}"] = 1.0 + 0.1 * jax.random.normal(kg, (1, fan_out), jnp.float32)
        params[f"be{li+1}"] = 0.1 * jax.random.normal(kbe, (1, fan_out), jnp.float32)
        params[f"m{li+1}"] = 0.1 * jax.random.normal(km, (1, fan_out), jnp.float32)
        params[f"v{li+1}"] = 1.0 + 0.1 * jax.random.uniform(kv, (1, fan_out), jnp.float32)
    return params


def encoder_reference(x, params):
    """Pure-JAX f32 reference of the original eval-mode forward pass."""
    def bn_relu(z, g, be, m, v):
        return jnp.maximum(g * (z - m) / jnp.sqrt(v + BN_EPS) + be, 0.0)

    h = x
    for li in range(1, 4):
        h = h @ params[f"w{li}"] + params[f"b{li}"]
        h = bn_relu(h, params[f"g{li}"], params[f"be{li}"],
                    params[f"m{li}"], params[f"v{li}"])
    return h


if __name__ == "__main__":
    key = jax.random.PRNGKey(0)
    k_param, k_x = jax.random.split(key)

    INPUT_SIZE = 28 * 28   # module default
    LATENT_DIM = 20        # module default
    BATCH = 8

    params = init_params(k_param, input_size=INPUT_SIZE, latent_dim=LATENT_DIM)
    x = jax.random.normal(k_x, (BATCH, INPUT_SIZE), jnp.float32)

    out = encoder_forward(x, params)
    out = jax.block_until_ready(out)

    ref = encoder_reference(x, params)
    assert out.shape == (BATCH, LATENT_DIM), out.shape
    # bf16 weights/activations -> looser tolerance vs the f32 reference.
    max_err = float(jnp.max(jnp.abs(out - ref)))
    assert jnp.allclose(out, ref, atol=2e-2, rtol=2e-2), max_err

    print("KERNEL_OK")
</pallas_src>

<mosaic_0001>
module attributes {stable_mosaic.version = 11 : i64} {
  func.func @encoder_kernel(%arg0: i32, %arg1: memref<8x896xbf16, #tpu.memory_space<vmem>>, %arg2: memref<896x512xbf16, #tpu.memory_space<vmem>>, %arg3: memref<1x512xf32, #tpu.memory_space<vmem>>, %arg4: memref<512x128xbf16, #tpu.memory_space<vmem>>, %arg5: memref<1x128xf32, #tpu.memory_space<vmem>>, %arg6: memref<128x128xbf16, #tpu.memory_space<vmem>>, %arg7: memref<1x128xf32, #tpu.memory_space<vmem>>, %arg8: memref<8x128xf32, #tpu.memory_space<vmem>>) attributes {dimension_semantics = [#tpu.dimension_semantics<parallel>], iteration_bounds = array<i64: 1>, scalar_prefetch = 0 : i64, scratch_operands = 0 : i64, tpu.core_type = #tpu.core_type<tc>, window_params = [{transform_indices = @transform_0, window_bounds = array<i64: 8, 896>}, {pipeline_mode = #tpu.pipeline_mode<synchronous>, transform_indices = @transform_1, window_bounds = array<i64: 896, 512>}, {pipeline_mode = #tpu.pipeline_mode<synchronous>, transform_indices = @transform_2, window_bounds = array<i64: 1, 512>}, {pipeline_mode = #tpu.pipeline_mode<synchronous>, transform_indices = @transform_3, window_bounds = array<i64: 512, 128>}, {pipeline_mode = #tpu.pipeline_mode<synchronous>, transform_indices = @transform_4, window_bounds = array<i64: 1, 128>}, {pipeline_mode = #tpu.pipeline_mode<synchronous>, transform_indices = @transform_5, window_bounds = array<i64: 128, 128>}, {pipeline_mode = #tpu.pipeline_mode<synchronous>, transform_indices = @transform_6, window_bounds = array<i64: 1, 128>}, {transform_indices = @transform_7, window_bounds = array<i64: 8, 128>}]} {
    %c0 = arith.constant 0 : index
    %c0_0 = arith.constant 0 : index
    %0 = vector.load %arg1[%c0, %c0_0] : memref<8x896xbf16, #tpu.memory_space<vmem>>, vector<8x896xbf16>
    %c0_1 = arith.constant 0 : index
    %c0_2 = arith.constant 0 : index
    %1 = vector.load %arg2[%c0_1, %c0_2] : memref<896x512xbf16, #tpu.memory_space<vmem>>, vector<896x512xbf16>
    %cst = arith.constant dense<0.000000e+00> : vector<8x512xf32>
    %2 = tpu.matmul %0, %1, %cst {dimension_numbers = #tpu.dot_dimension_numbers<[1], [0], [0], [1], [0, 0, 1, 1], [], []>} : vector<8x896xbf16>, vector<896x512xbf16>, vector<8x512xf32> -> vector<8x512xf32>
    %c0_3 = arith.constant 0 : index
    %c0_4 = arith.constant 0 : index
    %3 = vector.load %arg3[%c0_3, %c0_4] : memref<1x512xf32, #tpu.memory_space<vmem>>, vector<1x512xf32>
    %4 = vector.broadcast %3 : vector<1x512xf32> to vector<8x512xf32>
    %5 = arith.addf %2, %4 : vector<8x512xf32>
    %cst_5 = arith.constant 0.000000e+00 : f32
    %6 = vector.broadcast %cst_5 : f32 to vector<8x512xf32>
    %7 = arith.maximumf %5, %6 : vector<8x512xf32>
    %8 = arith.truncf %7 : vector<8x512xf32> to vector<8x512xbf16>
    %c0_6 = arith.constant 0 : index
    %c0_7 = arith.constant 0 : index
    %9 = vector.load %arg4[%c0_6, %c0_7] : memref<512x128xbf16, #tpu.memory_space<vmem>>, vector<512x128xbf16>
    %cst_8 = arith.constant dense<0.000000e+00> : vector<8x128xf32>
    %10 = tpu.matmul %8, %9, %cst_8 {dimension_numbers = #tpu.dot_dimension_numbers<[1], [0], [0], [1], [0, 0, 1, 1], [], []>} : vector<8x512xbf16>, vector<512x128xbf16>, vector<8x128xf32> -> vector<8x128xf32>
    %c0_9 = arith.constant 0 : index
    %c0_10 = arith.constant 0 : index
    %11 = vector.load %arg5[%c0_9, %c0_10] : memref<1x128xf32, #tpu.memory_space<vmem>>, vector<1x128xf32>
    %12 = vector.broadcast %11 : vector<1x128xf32> to vector<8x128xf32>
    %13 = arith.addf %10, %12 : vector<8x128xf32>
    %cst_11 = arith.constant 0.000000e+00 : f32
    %14 = vector.broadcast %cst_11 : f32 to vector<8x128xf32>
    %15 = arith.maximumf %13, %14 : vector<8x128xf32>
    %16 = arith.truncf %15 : vector<8x128xf32> to vector<8x128xbf16>
    %c0_12 = arith.constant 0 : index
    %c0_13 = arith.constant 0 : index
    %17 = vector.load %arg6[%c0_12, %c0_13] : memref<128x128xbf16, #tpu.memory_space<vmem>>, vector<128x128xbf16>
    %cst_14 = arith.constant dense<0.000000e+00> : vector<8x128xf32>
    %18 = tpu.matmul %16, %17, %cst_14 {dimension_numbers = #tpu.dot_dimension_numbers<[1], [0], [0], [1], [0, 0, 1, 1], [], []>} : vector<8x128xbf16>, vector<128x128xbf16>, vector<8x128xf32> -> vector<8x128xf32>
    %c0_15 = arith.constant 0 : index
    %c0_16 = arith.constant 0 : index
    %19 = vector.load %arg7[%c0_15, %c0_16] : memref<1x128xf32, #tpu.memory_space<vmem>>, vector<1x128xf32>
    %20 = vector.broadcast %19 : vector<1x128xf32> to vector<8x128xf32>
    %21 = arith.addf %18, %20 : vector<8x128xf32>
    %cst_17 = arith.constant 0.000000e+00 : f32
    %22 = vector.broadcast %cst_17 : f32 to vector<8x128xf32>
    %23 = arith.maximumf %21, %22 : vector<8x128xf32>
    %c0_18 = arith.constant 0 : index
    %c0_19 = arith.constant 0 : index
    %24 = vector.load %arg8[%c0_18, %c0_19] : memref<8x128xf32, #tpu.memory_space<vmem>>, vector<8x128xf32>
    tpu.vector_store %arg8[%c0_18, %c0_19], %23 {strides = array<i32>} : memref<8x128xf32, #tpu.memory_space<vmem>>, vector<8x128xf32>,
    return
  }
  func.func @transform_0(%arg0: i32) -> (i32, i32) {
    %c0_i32 = arith.constant 0 : i32
    %c0_i32_0 = arith.constant 0 : i32
    return %arg0, %c0_i32 : i32, i32
  }
  func.func @transform_1(%arg0: i32) -> (i32, i32) {
    %c0_i32 = arith.constant 0 : i32
    %c0_i32_0 = arith.constant 0 : i32
    %c0_i32_1 = arith.constant 0 : i32
    return %c0_i32, %c0_i32_0 : i32, i32
  }
  func.func @transform_2(%arg0: i32) -> (i32, i32) {
    %c0_i32 = arith.constant 0 : i32
    %c0_i32_0 = arith.constant 0 : i32
    %c0_i32_1 = arith.constant 0 : i32
    return %c0_i32, %c0_i32_0 : i32, i32
  }
  func.func @transform_3(%arg0: i32) -> (i32, i32) {
    %c0_i32 = arith.constant 0 : i32
    %c0_i32_0 = arith.constant 0 : i32
    %c0_i32_1 = arith.constant 0 : i32
    return %c0_i32, %c0_i32_0 : i32, i32
  }
  func.func @transform_4(%arg0: i32) -> (i32, i32) {
    %c0_i32 = arith.constant 0 : i32
    %c0_i32_0 = arith.constant 0 : i32
    %c0_i32_1 = arith.constant 0 : i32
    return %c0_i32, %c0_i32_0 : i32, i32
  }
  func.func @transform_5(%arg0: i32) -> (i32, i32) {
    %c0_i32 = arith.constant 0 : i32
    %c0_i32_0 = arith.constant 0 : i32
    %c0_i32_1 = arith.constant 0 : i32
    return %c0_i32, %c0_i32_0 : i32, i32
  }
  func.func @transform_6(%arg0: i32) -> (i32, i32) {
    %c0_i32 = arith.constant 0 : i32
    %c0_i32_0 = arith.constant 0 : i32
    %c0_i32_1 = arith.constant 0 : i32
    return %c0_i32, %c0_i32_0 : i32, i32
  }
  func.func @transform_7(%arg0: i32) -> (i32, i32) {
    %c0_i32 = arith.constant 0 : i32
    %c0_i32_0 = arith.constant 0 : i32
    return %arg0, %c0_i32 : i32, i32
  }
}

</mosaic_0001>

<llo_original>
// kernel: encoder_forward.1
$region0: #{encoder_forward.1}
  #allocation0 [shape = 'u32[]', space=smem, size = 0x4, offset = 0x4, fixed_abs, tag = 'smem constant byte address 0x4 - core index']
  #allocation1 [shape = 'u32[72,128]{1,0:T(1,128)}', space=vmem, size = 0x9000, scoped, tag = 'internal scratch']
  %s0 = inlined_call_operand.vmem [shape: bf16[8,896], index: 0, kind: input, shape index: {}]
  %s1 = inlined_call_operand.vmem [shape: bf16[896,512], index: 1, kind: input, shape index: {}]
  %s2 = inlined_call_operand.vmem [shape: f32[1,512], index: 2, kind: input, shape index: {}]
  %s3 = inlined_call_operand.vmem [shape: bf16[512,128], index: 3, kind: input, shape index: {}]
  %s4 = inlined_call_operand.vmem [shape: f32[1,128], index: 4, kind: input, shape index: {}]
  %s5 = inlined_call_operand.vmem [shape: bf16[128,128], index: 5, kind: input, shape index: {}]
  %s6 = inlined_call_operand.vmem [shape: f32[1,128], index: 6, kind: input, shape index: {}]
  %s7 = inlined_call_operand.hbm [shape: f32[8,128], index: 7, kind: output, shape index: {}]
  %s8 = sld [smem:[#allocation0]]
  $region38: #{encoder_forward.1} parent=0
    _
  %s10 = ssub.s32 1, %s8
  %s11 = scalar_select 0, %s10, %s8
  $region1: #{encoder_forward.1} parent=0
    #allocation2 [shape = 'u8[4096]{0}', space=vmem, size = 0x1000, scoped, tag = 'output window, operand 0, single buffered']
    #allocation3 [shape = 's32[1]{0}', space=sflag, size = 0x4, scoped, tag = 'scoped memory for encoder_forward.1']
    %12 = vsyncpa [#allocation3], 0
    // Predicated region
    $region2: #{encoder_forward.1} parent=1 // pred_check
      _
    $region3: #{encoder_forward.1} parent=1 // pred_check_branch
      %14 = sbr.rel (0) target = $region5
    $region4: #{encoder_forward.1} parent=1 // pred_region
      _
    $region5: #{encoder_forward.1} parent=1 // pred_fallthru
      _
    // Predicated region
    $region6: #{encoder_forward.1} parent=1 // pred_check
      _
    $region7: #{encoder_forward.1} parent=1 // pred_check_branch
      %16 = sbr.rel (0) target = $region9
    $region8: #{encoder_forward.1} parent=1 // pred_region
      _
    $region9: #{encoder_forward.1} parent=1 // pred_fallthru
      _
    // Predicated region
    $region10: #{encoder_forward.1} parent=1 // pred_check
      _
    $region11: #{encoder_forward.1} parent=1 // pred_check_branch
      %18 = sbr.rel (0) target = $region13
    $region12: #{encoder_forward.1} parent=1 // pred_region
      _
    $region13: #{encoder_forward.1} parent=1 // pred_fallthru
      _
    // Predicated region
    $region14: #{encoder_forward.1} parent=1 // pred_check
      _
    $region15: #{encoder_forward.1} parent=1 // pred_check_branch
      %20 = sbr.rel (0) target = $region17
    $region16: #{encoder_forward.1} parent=1 // pred_region
      _
    $region17: #{encoder_forward.1} parent=1 // pred_fallthru
      _
    // Predicated region
    $region18: #{encoder_forward.1} parent=1 // pred_check
      _
    $region19: #{encoder_forward.1} parent=1 // pred_check_branch
      %22 = sbr.rel (0) target = $region21
    $region20: #{encoder_forward.1} parent=1 // pred_region
      _
    $region21: #{encoder_forward.1} parent=1 // pred_fallthru
      _
    // Predicated region
    $region22: #{encoder_forward.1} parent=1 // pred_check
      _
    $region23: #{encoder_forward.1} parent=1 // pred_check_branch
      %24 = sbr.rel (0) target = $region25
    $region24: #{encoder_forward.1} parent=1 // pred_region
      _
    $region25: #{encoder_forward.1} parent=1 // pred_fallthru
      _
    // Predicated region
    $region26: #{encoder_forward.1} parent=1 // pred_check
      _
    $region27: #{encoder_forward.1} parent=1 // pred_check_branch
      %26 = sbr.rel (0) target = $region29
    $region28: #{encoder_forward.1} parent=1 // pred_region
      _
    $region29: #{encoder_forward.1} parent=1 // pred_fallthru
      _
    %v27 = vld [vmem:[%s0] sm:$0xff]
    %v28 = vld [vmem:[%s0 + $0x8] sm:$0xff]
    %v29 = vld [vmem:[%s0 + $0x10] sm:$0xff]
    %v30 = vld [vmem:[%s0 + $0x18] sm:$0xf]
    %v31 = vld [vmem:[%s1] sm:$0xff]
    %v32 = vld [vmem:[%s1 + $0x8] sm:$0xff]
    %v33 = vld [vmem:[%s1 + $0x10] sm:$0xff]
    %v34 = vld [vmem:[%s1 + $0x18] sm:$0xff]
    %v35 = vld [vmem:[%s1 + $0x20] sm:$0xff]
    %v36 = vld [vmem:[%s1 + $0x28] sm:$0xff]
    %v37 = vld [vmem:[%s1 + $0x30] sm:$0xff]
    %v38 = vld [vmem:[%s1 + $0x38] sm:$0xff]
    %v39 = vld [vmem:[%s1 + $0x40] sm:$0xff]
    %v40 = vld [vmem:[%s1 + $0x48] sm:$0xff]
    %v41 = vld [vmem:[%s1 + $0x50] sm:$0xff]
    %v42 = vld [vmem:[%s1 + $0x58] sm:$0xff]
    %v43 = vld [vmem:[%s1 + $0x60] sm:$0xff]
    %v44 = vld [vmem:[%s1 + $0x68] sm:$0xff]
    %v45 = vld [vmem:[%s1 + $0x70] sm:$0xff]
    %v46 = vld [vmem:[%s1 + $0x78] sm:$0xff]
    %v47 = vld [vmem:[%s1 + $0x80] sm:$0xff]
    %v48 = vld [vmem:[%s1 + $0x88] sm:$0xff]
    %v49 = vld [vmem:[%s1 + $0x90] sm:$0xff]
    %v50 = vld [vmem:[%s1 + $0x98] sm:$0xff]
    %v51 = vld [vmem:[%s1 + $0xa0] sm:$0xff]
    %v52 = vld [vmem:[%s1 + $0xa8] sm:$0xff]
    %v53 = vld [vmem:[%s1 + $0xb0] sm:$0xff]
    %v54 = vld [vmem:[%s1 + $0xb8] sm:$0xff]
    %v55 = vld [vmem:[%s1 + $0xc0] sm:$0xff]
    %v56 = vld [vmem:[%s1 + $0xc8] sm:$0xff]
    %v57 = vld [vmem:[%s1 + $0xd0] sm:$0xff]
    %v58 = vld [vmem:[%s1 + $0xd8] sm:$0xff]
    %v59 = vld [vmem:[%s1 + $0xe0] sm:$0xff]
    %v60 = vld [vmem:[%s1 + $0xe8] sm:$0xff]
    %v61 = vld [vmem:[%s1 + $0xf0] sm:$0xff]
    %v62 = vld [vmem:[%s1 + $0xf8] sm:$0xff]
    %v63 = vld [vmem:[%s1 + $0x100] sm:$0xff]
    %v64 = vld [vmem:[%s1 + $0x108] sm:$0xff]
    %v65 = vld [vmem:[%s1 + $0x110] sm:$0xff]
    %v66 = vld [vmem:[%s1 + $0x118] sm:$0xff]
    %v67 = vld [vmem:[%s1 + $0x120] sm:$0xff]
    %v68 = vld [vmem:[%s1 + $0x128] sm:$0xff]
    %v69 = vld [vmem:[%s1 + $0x130] sm:$0xff]
    %v70 = vld [vmem:[%s1 + $0x138] sm:$0xff]
    %v71 = vld [vmem:[%s1 + $0x140] sm:$0xff]
    %v72 = vld [vmem:[%s1 + $0x148] sm:$0xff]
    %v73 = vld [vmem:[%s1 + $0x150] sm:$0xff]
    %v74 = vld [vmem:[%s1 + $0x158] sm:$0xff]
    %v75 = vld [vmem:[%s1 + $0x160] sm:$0xff]
    %v76 = vld [vmem:[%s1 + $0x168] sm:$0xff]
    %v77 = vld [vmem:[%s1 + $0x170] sm:$0xff]
    %v78 = vld [vmem:[%s1 + $0x178] sm:$0xff]
    %v79 = vld [vmem:[%s1 + $0x180] sm:$0xff]
    %v80 = vld [vmem:[%s1 + $0x188] sm:$0xff]
    %v81 = vld [vmem:[%s1 + $0x190] sm:$0xff]
    %v82 = vld [vmem:[%s1 + $0x198] sm:$0xff]
    %v83 = vld [vmem:[%s1 + $0x1a0] sm:$0xff]
    %v84 = vld [vmem:[%s1 + $0x1a8] sm:$0xff]
    %v85 = vld [vmem:[%s1 + $0x1b0] sm:$0xff]
    %v86 = vld [vmem:[%s1 + $0x1b8] sm:$0xff]
    %v87 = vld [vmem:[%s1 + $0x1c0] sm:$0xff]
    %v88 = vld [vmem:[%s1 + $0x1c8] sm:$0xff]
    %v89 = vld [vmem:[%s1 + $0x1d0] sm:$0xff]
    %v90 = vld [vmem:[%s1 + $0x1d8] sm:$0xff]
    %v91 = vld [vmem:[%s1 + $0x1e0] sm:$0xff]
    %v92 = vld [vmem:[%s1 + $0x1e8] sm:$0xff]
    %v93 = vld [vmem:[%s1 + $0x1f0] sm:$0xff]
    %v94 = vld [vmem:[%s1 + $0x1f8] sm:$0xff]
    %v95 = vld [vmem:[%s1 + $0x200] sm:$0xff]
    %v96 = vld [vmem:[%s1 + $0x208] sm:$0xff]
    %v97 = vld [vmem:[%s1 + $0x210] sm:$0xff]
    %v98 = vld [vmem:[%s1 + $0x218] sm:$0xff]
    %v99 = vld [vmem:[%s1 + $0x220] sm:$0xff]
    %v100 = vld [vmem:[%s1 + $0x228] sm:$0xff]
    %v101 = vld [vmem:[%s1 + $0x230] sm:$0xff]
    %v102 = vld [vmem:[%s1 + $0x238] sm:$0xff]
    %v103 = vld [vmem:[%s1 + $0x240] sm:$0xff]
    %v104 = vld [vmem:[%s1 + $0x248] sm:$0xff]
    %v105 = vld [vmem:[%s1 + $0x250] sm:$0xff]
    %v106 = vld [vmem:[%s1 + $0x258] sm:$0xff]
    %v107 = vld [vmem:[%s1 + $0x260] sm:$0xff]
    %v108 = vld [vmem:[%s1 + $0x268] sm:$0xff]
    %v109 = vld [vmem:[%s1 + $0x270] sm:$0xff]
    %v110 = vld [vmem:[%s1 + $0x278] sm:$0xff]
    %v111 = vld [vmem:[%s1 + $0x280] sm:$0xff]
    %v112 = vld [vmem:[%s1 + $0x288] sm:$0xff]
    %v113 = vld [vmem:[%s1 + $0x290] sm:$0xff]
    %v114 = vld [vmem:[%s1 + $0x298] sm:$0xff]
    %v115 = vld [vmem:[%s1 + $0x2a0] sm:$0xff]
    %v116 = vld [vmem:[%s1 + $0x2a8] sm:$0xff]
    %v117 = vld [vmem:[%s1 + $0x2b0] sm:$0xff]
    %v118 = vld [vmem:[%s1 + $0x2b8] sm:$0xff]
    %v119 = vld [vmem:[%s1 + $0x2c0] sm:$0xff]
    %v120 = vld [vmem:[%s1 + $0x2c8] sm:$0xff]
    %v121 = vld [vmem:[%s1 + $0x2d0] sm:$0xff]
    %v122 = vld [vmem:[%s1 + $0x2d8] sm:$0xff]
    %v123 = vld [vmem:[%s1 + $0x2e0] sm:$0xff]
    %v124 = vld [vmem:[%s1 + $0x2e8] sm:$0xff]
    %v125 = vld [vmem:[%s1 + $0x2f0] sm:$0xff]
    %v126 = vld [vmem:[%s1 + $0x2f8] sm:$0xff]
    %v127 = vld [vmem:[%s1 + $0x300] sm:$0xff]
    %v128 = vld [vmem:[%s1 + $0x308] sm:$0xff]
    %v129 = vld [vmem:[%s1 + $0x310] sm:$0xff]
    %v130 = vld [vmem:[%s1 + $0x318] sm:$0xff]
    %v131 = vld [vmem:[%s1 + $0x320] sm:$0xff]
    %v132 = vld [vmem:[%s1 + $0x328] sm:$0xff]
    %v133 = vld [vmem:[%s1 + $0x330] sm:$0xff]
    %v134 = vld [vmem:[%s1 + $0x338] sm:$0xff]
    %v135 = vld [vmem:[%s1 + $0x340] sm:$0xff]
    %v136 = vld [vmem:[%s1 + $0x348] sm:$0xff]
    %v137 = vld [vmem:[%s1 + $0x350] sm:$0xff]
    %v138 = vld [vmem:[%s1 + $0x358] sm:$0xff]
    %v139 = vld [vmem:[%s1 + $0x360] sm:$0xff]
    %v140 = vld [vmem:[%s1 + $0x368] sm:$0xff]
    %v141 = vld [vmem:[%s1 + $0x370] sm:$0xff]
    %v142 = vld [vmem:[%s1 + $0x378] sm:$0xff]
    %v143 = vld [vmem:[%s1 + $0x380] sm:$0xff]
    %v144 = vld [vmem:[%s1 + $0x388] sm:$0xff]
    %v145 = vld [vmem:[%s1 + $0x390] sm:$0xff]
    %v146 = vld [vmem:[%s1 + $0x398] sm:$0xff]
    %v147 = vld [vmem:[%s1 + $0x3a0] sm:$0xff]
    %v148 = vld [vmem:[%s1 + $0x3a8] sm:$0xff]
    %v149 = vld [vmem:[%s1 + $0x3b0] sm:$0xff]
    %v150 = vld [vmem:[%s1 + $0x3b8] sm:$0xff]
    %v151 = vld [vmem:[%s1 + $0x3c0] sm:$0xff]
    %v152 = vld [vmem:[%s1 + $0x3c8] sm:$0xff]
    %v153 = vld [vmem:[%s1 + $0x3d0] sm:$0xff]
    %v154 = vld [vmem:[%s1 + $0x3d8] sm:$0xff]
    %v155 = vld [vmem:[%s1 + $0x3e0] sm:$0xff]
    %v156 = vld [vmem:[%s1 + $0x3e8] sm:$0xff]
    %v157 = vld [vmem:[%s1 + $0x3f0] sm:$0xff]
    %v158 = vld [vmem:[%s1 + $0x3f8] sm:$0xff]
    %v159 = vld [vmem:[%s1 + $0x400] sm:$0xff]
    %v160 = vld [vmem:[%s1 + $0x408] sm:$0xff]
    %v161 = vld [vmem:[%s1 + $0x410] sm:$0xff]
    %v162 = vld [vmem:[%s1 + $0x418] sm:$0xff]
    %v163 = vld [vmem:[%s1 + $0x420] sm:$0xff]
    %v164 = vld [vmem:[%s1 + $0x428] sm:$0xff]
    %v165 = vld [vmem:[%s1 + $0x430] sm:$0xff]
    %v166 = vld [vmem:[%s1 + $0x438] sm:$0xff]
    %v167 = vld [vmem:[%s1 + $0x440] sm:$0xff]
    %v168 = vld [vmem:[%s1 + $0x448] sm:$0xff]
    %v169 = vld [vmem:[%s1 + $0x450] sm:$0xff]
    %v170 = vld [vmem:[%s1 + $0x458] sm:$0xff]
    %v171 = vld [vmem:[%s1 + $0x460] sm:$0xff]
    %v172 = vld [vmem:[%s1 + $0x468] sm:$0xff]
    %v173 = vld [vmem:[%s1 + $0x470] sm:$0xff]
    %v174 = vld [vmem:[%s1 + $0x478] sm:$0xff]
    %v175 = vld [vmem:[%s1 + $0x480] sm:$0xff]
    %v176 = vld [vmem:[%s1 + $0x488] sm:$0xff]
    %v177 = vld [vmem:[%s1 + $0x490] sm:$0xff]
    %v178 = vld [vmem:[%s1 + $0x498] sm:$0xff]
    %v179 = vld [vmem:[%s1 + $0x4a0] sm:$0xff]
    %v180 = vld [vmem:[%s1 + $0x4a8] sm:$0xff]
    %v181 = vld [vmem:[%s1 + $0x4b0] sm:$0xff]
    %v182 = vld [vmem:[%s1 + $0x4b8] sm:$0xff]
    %v183 = vld [vmem:[%s1 + $0x4c0] sm:$0xff]
    %v184 = vld [vmem:[%s1 + $0x4c8] sm:$0xff]
    %v185 = vld [vmem:[%s1 + $0x4d0] sm:$0xff]
    %v186 = vld [vmem:[%s1 + $0x4d8] sm:$0xff]
    %v187 = vld [vmem:[%s1 + $0x4e0] sm:$0xff]
    %v188 = vld [vmem:[%s1 + $0x4e8] sm:$0xff]
    %v189 = vld [vmem:[%s1 + $0x4f0] sm:$0xff]
    %v190 = vld [vmem:[%s1 + $0x4f8] sm:$0xff]
    %v191 = vld [vmem:[%s1 + $0x500] sm:$0xff]
    %v192 = vld [vmem:[%s1 + $0x508] sm:$0xff]
    %v193 = vld [vmem:[%s1 + $0x510] sm:$0xff]
    %v194 = vld [vmem:[%s1 + $0x518] sm:$0xff]
    %v195 = vld [vmem:[%s1 + $0x520] sm:$0xff]
    %v196 = vld [vmem:[%s1 + $0x528] sm:$0xff]
    %v197 = vld [vmem:[%s1 + $0x530] sm:$0xff]
    %v198 = vld [vmem:[%s1 + $0x538] sm:$0xff]
    %v199 = vld [vmem:[%s1 + $0x540] sm:$0xff]
    %v200 = vld [vmem:[%s1 + $0x548] sm:$0xff]
    %v201 = vld [vmem:[%s1 + $0x550] sm:$0xff]
    %v202 = vld [vmem:[%s1 + $0x558] sm:$0xff]
    %v203 = vld [vmem:[%s1 + $0x560] sm:$0xff]
    %v204 = vld [vmem:[%s1 + $0x568] sm:$0xff]
    %v205 = vld [vmem:[%s1 + $0x570] sm:$0xff]
    %v206 = vld [vmem:[%s1 + $0x578] sm:$0xff]
    %v207 = vld [vmem:[%s1 + $0x580] sm:$0xff]
    %v208 = vld [vmem:[%s1 + $0x588] sm:$0xff]
    %v209 = vld [vmem:[%s1 + $0x590] sm:$0xff]
    %v210 = vld [vmem:[%s1 + $0x598] sm:$0xff]
    %v211 = vld [vmem:[%s1 + $0x5a0] sm:$0xff]
    %v212 = vld [vmem:[%s1 + $0x5a8] sm:$0xff]
    %v213 = vld [vmem:[%s1 + $0x5b0] sm:$0xff]
    %v214 = vld [vmem:[%s1 + $0x5b8] sm:$0xff]
    %v215 = vld [vmem:[%s1 + $0x5c0] sm:$0xff]
    %v216 = vld [vmem:[%s1 + $0x5c8] sm:$0xff]
    %v217 = vld [vmem:[%s1 + $0x5d0] sm:$0xff]
    %v218 = vld [vmem:[%s1 + $0x5d8] sm:$0xff]
    %v219 = vld [vmem:[%s1 + $0x5e0] sm:$0xff]
    %v220 = vld [vmem:[%s1 + $0x5e8] sm:$0xff]
    %v221 = vld [vmem:[%s1 + $0x5f0] sm:$0xff]
    %v222 = vld [vmem:[%s1 + $0x5f8] sm:$0xff]
    %v223 = vld [vmem:[%s1 + $0x600] sm:$0xff]
    %v224 = vld [vmem:[%s1 + $0x608] sm:$0xff]
    %v225 = vld [vmem:[%s1 + $0x610] sm:$0xff]
    %v226 = vld [vmem:[%s1 + $0x618] sm:$0xff]
    %v227 = vld [vmem:[%s1 + $0x620] sm:$0xff]
    %v228 = vld [vmem:[%s1 + $0x628] sm:$0xff]
    %v229 = vld [vmem:[%s1 + $0x630] sm:$0xff]
    %v230 = vld [vmem:[%s1 + $0x638] sm:$0xff]
    %v231 = vld [vmem:[%s1 + $0x640] sm:$0xff]
    %v232 = vld [vmem:[%s1 + $0x648] sm:$0xff]
    %v233 = vld [vmem:[%s1 + $0x650] sm:$0xff]
    %v234 = vld [vmem:[%s1 + $0x658] sm:$0xff]
    %v235 = vld [vmem:[%s1 + $0x660] sm:$0xff]
    %v236 = vld [vmem:[%s1 + $0x668] sm:$0xff]
    %v237 = vld [vmem:[%s1 + $0x670] sm:$0xff]
    %v238 = vld [vmem:[%s1 + $0x678] sm:$0xff]
    %v239 = vld [vmem:[%s1 + $0x680] sm:$0xff]
    %v240 = vld [vmem:[%s1 + $0x688] sm:$0xff]
    %v241 = vld [vmem:[%s1 + $0x690] sm:$0xff]
    %v242 = vld [vmem:[%s1 + $0x698] sm:$0xff]
    %v243 = vld [vmem:[%s1 + $0x6a0] sm:$0xff]
    %v244 = vld [vmem:[%s1 + $0x6a8] sm:$0xff]
    %v245 = vld [vmem:[%s1 + $0x6b0] sm:$0xff]
    %v246 = vld [vmem:[%s1 + $0x6b8] sm:$0xff]
    %v247 = vld [vmem:[%s1 + $0x6c0] sm:$0xff]
    %v248 = vld [vmem:[%s1 + $0x6c8] sm:$0xff]
    %v249 = vld [vmem:[%s1 + $0x6d0] sm:$0xff]
    %v250 = vld [vmem:[%s1 + $0x6d8] sm:$0xff]
    %v251 = vld [vmem:[%s1 + $0x6e0] sm:$0xff]
    %v252 = vld [vmem:[%s1 + $0x6e8] sm:$0xff]
    %v253 = vld [vmem:[%s1 + $0x6f0] sm:$0xff]
    %v254 = vld [vmem:[%s1 + $0x6f8] sm:$0xff]
    %v255 = vld [vmem:[%s2] sm:$0xf]
    %v257 = vperm.slane %v255, 0
    %v258 = vperm.slane %v255, 1
    %v259 = vperm.slane %v255, 2
    %v260 = vperm.slane %v255, 3
    %v269 = vunpack.c.l.b16 %v27
    %v270 = vunpack.c.h.b16 %v27
    %v271 = vunpack.c.l.b16 %v28
    %v272 = vunpack.c.h.b16 %v28
    %v273 = vunpack.c.l.b16 %v29
    %v274 = vunpack.c.h.b16 %v29
    %v275 = vunpack.c.l.b16 %v30
    %v276 = vpack.c.b16 %v269, %v269
    %v277 = vpack.c.b16 %v270, %v270
    %v278 = vpack.c.b16 %v271, %v271
    %v279 = vpack.c.b16 %v272, %v272
    %v280 = vpack.c.b16 %v273, %v273
    %v281 = vpack.c.b16 %v274, %v274
    %v282 = vpack.c.b16 %v275, %v275
    %v514 = vunpack.c.l.b16 %v31
    %v515 = vunpack.c.h.b16 %v31
    %v516 = vunpack.c.l.b16 %v32
    %v517 = vunpack.c.h.b16 %v32
    %v518 = vunpack.c.l.b16 %v33
    %v519 = vunpack.c.h.b16 %v33
    %v520 = vunpack.c.l.b16 %v34
    %v521 = vunpack.c.h.b16 %v34
    %v522 = vunpack.c.l.b16 %v35
    %v523 = vunpack.c.h.b16 %v35
    %v524 = vunpack.c.l.b16 %v36
    %v525 = vunpack.c.h.b16 %v36
    %v526 = vunpack.c.l.b16 %v37
    %v527 = vunpack.c.h.b16 %v37
    %v528 = vunpack.c.l.b16 %v38
    %v529 = vunpack.c.h.b16 %v38
    %v530 = vunpack.c.l.b16 %v39
    %v531 = vunpack.c.h.b16 %v39
    %v532 = vunpack.c.l.b16 %v40
    %v533 = vunpack.c.h.b16 %v40
    %v534 = vunpack.c.l.b16 %v41
    %v535 = vunpack.c.h.b16 %v41
    %v536 = vunpack.c.l.b16 %v42
    %v537 = vunpack.c.h.b16 %v42
    %v538 = vunpack.c.l.b16 %v43
    %v539 = vunpack.c.h.b16 %v43
    %v540 = vunpack.c.l.b16 %v44
    %v541 = vunpack.c.h.b16 %v44
    %v542 = vunpack.c.l.b16 %v45
    %v543 = vunpack.c.h.b16 %v45
    %v544 = vunpack.c.l.b16 %v46
    %v545 = vunpack.c.h.b16 %v46
    %v546 = vunpack.c.l.b16 %v47
    %v547 = vunpack.c.h.b16 %v47
    %v548 = vunpack.c.l.b16 %v48
    %v549 = vunpack.c.h.b16 %v48
    %v550 = vunpack.c.l.b16 %v49
    %v551 = vunpack.c.h.b16 %v49
    %v552 = vunpack.c.l.b16 %v50
    %v553 = vunpack.c.h.b16 %v50
    %v554 = vunpack.c.l.b16 %v51
    %v555 = vunpack.c.h.b16 %v51
    %v556 = vunpack.c.l.b16 %v52
    %v557 = vunpack.c.h.b16 %v52
    %v558 = vunpack.c.l.b16 %v53
    %v559 = vunpack.c.h.b16 %v53
    %v560 = vunpack.c.l.b16 %v54
    %v561 = vunpack.c.h.b16 %v54
    %v562 = vunpack.c.l.b16 %v55
    %v563 = vunpack.c.h.b16 %v55
    %v564 = vunpack.c.l.b16 %v56
    %v565 = vunpack.c.h.b16 %v56
    %v566 = vunpack.c.l.b16 %v57
    %v567 = vunpack.c.h.b16 %v57
    %v568 = vunpack.c.l.b16 %v58
    %v569 = vunpack.c.h.b16 %v58
    %v570 = vunpack.c.l.b16 %v59
    %v571 = vunpack.c.h.b16 %v59
    %v572 = vunpack.c.l.b16 %v60
    %v573 = vunpack.c.h.b16 %v60
    %v574 = vunpack.c.l.b16 %v61
    %v575 = vunpack.c.h.b16 %v61
    %v576 = vunpack.c.l.b16 %v62
    %v577 = vunpack.c.h.b16 %v62
    %v578 = vunpack.c.l.b16 %v63
    %v579 = vunpack.c.h.b16 %v63
    %v580 = vunpack.c.l.b16 %v64
    %v581 = vunpack.c.h.b16 %v64
    %v582 = vunpack.c.l.b16 %v65
    %v583 = vunpack.c.h.b16 %v65
    %v584 = vunpack.c.l.b16 %v66
    %v585 = vunpack.c.h.b16 %v66
    %v586 = vunpack.c.l.b16 %v67
    %v587 = vunpack.c.h.b16 %v67
    %v588 = vunpack.c.l.b16 %v68
    %v589 = vunpack.c.h.b16 %v68
    %v590 = vunpack.c.l.b16 %v69
    %v591 = vunpack.c.h.b16 %v69
    %v592 = vunpack.c.l.b16 %v70
    %v593 = vunpack.c.h.b16 %v70
    %v594 = vunpack.c.l.b16 %v71
    %v595 = vunpack.c.h.b16 %v71
    %v596 = vunpack.c.l.b16 %v72
    %v597 = vunpack.c.h.b16 %v72
    %v598 = vunpack.c.l.b16 %v73
    %v599 = vunpack.c.h.b16 %v73
    %v600 = vunpack.c.l.b16 %v74
    %v601 = vunpack.c.h.b16 %v74
    %v602 = vunpack.c.l.b16 %v75
    %v603 = vunpack.c.h.b16 %v75
    %v604 = vunpack.c.l.b16 %v76
    %v605 = vunpack.c.h.b16 %v76
    %v606 = vunpack.c.l.b16 %v77
    %v607 = vunpack.c.h.b16 %v77
    %v608 = vunpack.c.l.b16 %v78
    %v609 = vunpack.c.h.b16 %v78
    %v610 = vunpack.c.l.b16 %v79
    %v611 = vunpack.c.h.b16 %v79
    %v612 = vunpack.c.l.b16 %v80
    %v613 = vunpack.c.h.b16 %v80
    %v614 = vunpack.c.l.b16 %v81
    %v615 = vunpack.c.h.b16 %v81
    %v616 = vunpack.c.l.b16 %v82
    %v617 = vunpack.c.h.b16 %v82
    %v618 = vunpack.c.l.b16 %v83
    %v619 = vunpack.c.h.b16 %v83
    %v620 = vunpack.c.l.b16 %v84
    %v621 = vunpack.c.h.b16 %v84
    %v622 = vunpack.c.l.b16 %v85
    %v623 = vunpack.c.h.b16 %v85
    %v624 = vunpack.c.l.b16 %v86
    %v625 = vunpack.c.h.b16 %v86
    %v626 = vunpack.c.l.b16 %v87
    %v627 = vunpack.c.h.b16 %v87
    %v628 = vunpack.c.l.b16 %v88
    %v629 = vunpack.c.h.b16 %v88
    %v630 = vunpack.c.l.b16 %v89
    %v631 = vunpack.c.h.b16 %v89
    %v632 = vunpack.c.l.b16 %v90
    %v633 = vunpack.c.h.b16 %v90
    %v634 = vunpack.c.l.b16 %v91
    %v635 = vunpack.c.h.b16 %v91
    %v636 = vunpack.c.l.b16 %v92
    %v637 = vunpack.c.h.b16 %v92
    %v638 = vunpack.c.l.b16 %v93
    %v639 = vunpack.c.h.b16 %v93
    %v640 = vunpack.c.l.b16 %v94
    %v641 = vunpack.c.h.b16 %v94
    %v642 = vunpack.c.l.b16 %v95
    %v643 = vunpack.c.h.b16 %v95
    %v644 = vunpack.c.l.b16 %v96
    %v645 = vunpack.c.h.b16 %v96
    %v646 = vunpack.c.l.b16 %v97
    %v647 = vunpack.c.h.b16 %v97
    %v648 = vunpack.c.l.b16 %v98
    %v649 = vunpack.c.h.b16 %v98
    %v650 = vunpack.c.l.b16 %v99
    %v651 = vunpack.c.h.b16 %v99
    %v652 = vunpack.c.l.b16 %v100
    %v653 = vunpack.c.h.b16 %v100
    %v654 = vunpack.c.l.b16 %v101
    %v655 = vunpack.c.h.b16 %v101
    %v656 = vunpack.c.l.b16 %v102
    %v657 = vunpack.c.h.b16 %v102
    %v658 = vunpack.c.l.b16 %v103
    %v659 = vunpack.c.h.b16 %v103
    %v660 = vunpack.c.l.b16 %v104
    %v661 = vunpack.c.h.b16 %v104
    %v662 = vunpack.c.l.b16 %v105
    %v663 = vunpack.c.h.b16 %v105
    %v664 = vunpack.c.l.b16 %v106
    %v665 = vunpack.c.h.b16 %v106
    %v666 = vunpack.c.l.b16 %v107
    %v667 = vunpack.c.h.b16 %v107
    %v668 = vunpack.c.l.b16 %v108
    %v669 = vunpack.c.h.b16 %v108
    %v670 = vunpack.c.l.b16 %v109
    %v671 = vunpack.c.h.b16 %v109
    %v672 = vunpack.c.l.b16 %v110
    %v673 = vunpack.c.h.b16 %v110
    %v674 = vunpack.c.l.b16 %v111
    %v675 = vunpack.c.h.b16 %v111
    %v676 = vunpack.c.l.b16 %v112
    %v677 = vunpack.c.h.b16 %v112
    %v678 = vunpack.c.l.b16 %v113
    %v679 = vunpack.c.h.b16 %v113
    %v680 = vunpack.c.l.b16 %v114
    %v681 = vunpack.c.h.b16 %v114
    %v682 = vunpack.c.l.b16 %v115
    %v683 = vunpack.c.h.b16 %v115
    %v684 = vunpack.c.l.b16 %v116
    %v685 = vunpack.c.h.b16 %v116
    %v686 = vunpack.c.l.b16 %v117
    %v687 = vunpack.c.h.b16 %v117
    %v688 = vunpack.c.l.b16 %v118
    %v689 = vunpack.c.h.b16 %v118
    %v690 = vunpack.c.l.b16 %v119
    %v691 = vunpack.c.h.b16 %v119
    %v692 = vunpack.c.l.b16 %v120
    %v693 = vunpack.c.h.b16 %v120
    %v694 = vunpack.c.l.b16 %v121
    %v695 = vunpack.c.h.b16 %v121
    %v696 = vunpack.c.l.b16 %v122
    %v697 = vunpack.c.h.b16 %v122
    %v698 = vunpack.c.l.b16 %v123
    %v699 = vunpack.c.h.b16 %v123
    %v700 = vunpack.c.l.b16 %v124
    %v701 = vunpack.c.h.b16 %v124
    %v702 = vunpack.c.l.b16 %v125
    %v703 = vunpack.c.h.b16 %v125
    %v704 = vunpack.c.l.b16 %v126
    %v705 = vunpack.c.h.b16 %v126
    %v706 = vunpack.c.l.b16 %v127
    %v707 = vunpack.c.h.b16 %v127
    %v708 = vunpack.c.l.b16 %v128
    %v709 = vunpack.c.h.b16 %v128
    %v710 = vunpack.c.l.b16 %v129
    %v711 = vunpack.c.h.b16 %v129
    %v712 = vunpack.c.l.b16 %v130
    %v713 = vunpack.c.h.b16 %v130
    %v714 = vunpack.c.l.b16 %v131
    %v715 = vunpack.c.h.b16 %v131
    %v716 = vunpack.c.l.b16 %v132
    %v717 = vunpack.c.h.b16 %v132
    %v718 = vunpack.c.l.b16 %v133
    %v719 = vunpack.c.h.b16 %v133
    %v720 = vunpack.c.l.b16 %v134
    %v721 = vunpack.c.h.b16 %v134
    %v722 = vunpack.c.l.b16 %v135
    %v723 = vunpack.c.h.b16 %v135
    %v724 = vunpack.c.l.b16 %v136
    %v725 = vunpack.c.h.b16 %v136
    %v726 = vunpack.c.l.b16 %v137
    %v727 = vunpack.c.h.b16 %v137
    %v728 = vunpack.c.l.b16 %v138
    %v729 = vunpack.c.h.b16 %v138
    %v730 = vunpack.c.l.b16 %v139
    %v731 = vunpack.c.h.b16 %v139
    %v732 = vunpack.c.l.b16 %v140
    %v733 = vunpack.c.h.b16 %v140
    %v734 = vunpack.c.l.b16 %v141
    %v735 = vunpack.c.h.b16 %v141
    %v736 = vunpack.c.l.b16 %v142
    %v737 = vunpack.c.h.b16 %v142
    %v738 = vunpack.c.l.b16 %v143
    %v739 = vunpack.c.h.b16 %v143
    %v740 = vunpack.c.l.b16 %v144
    %v741 = vunpack.c.h.b16 %v144
    %v742 = vunpack.c.l.b16 %v145
    %v743 = vunpack.c.h.b16 %v145
    %v744 = vunpack.c.l.b16 %v146
    %v745 = vunpack.c.h.b16 %v146
    %v746 = vunpack.c.l.b16 %v147
    %v747 = vunpack.c.h.b16 %v147
    %v748 = vunpack.c.l.b16 %v148
    %v749 = vunpack.c.h.b16 %v148
    %v750 = vunpack.c.l.b16 %v149
    %v751 = vunpack.c.h.b16 %v149
    %v752 = vunpack.c.l.b16 %v150
    %v753 = vunpack.c.h.b16 %v150
    %v754 = vunpack.c.l.b16 %v151
    %v755 = vunpack.c.h.b16 %v151
    %v756 = vunpack.c.l.b16 %v152
    %v757 = vunpack.c.h.b16 %v152
    %v758 = vunpack.c.l.b16 %v153
    %v759 = vunpack.c.h.b16 %v153
    %v760 = vunpack.c.l.b16 %v154
    %v761 = vunpack.c.h.b16 %v154
    %v762 = vunpack.c.l.b16 %v155
    %v763 = vunpack.c.h.b16 %v155
    %v764 = vunpack.c.l.b16 %v156
    %v765 = vunpack.c.h.b16 %v156
    %v766 = vunpack.c.l.b16 %v157
    %v767 = vunpack.c.h.b16 %v157
    %v768 = vunpack.c.l.b16 %v158
    %v769 = vunpack.c.h.b16 %v158
    %v770 = vunpack.c.l.b16 %v159
    %v771 = vunpack.c.h.b16 %v159
    %v772 = vunpack.c.l.b16 %v160
    %v773 = vunpack.c.h.b16 %v160
    %v774 = vunpack.c.l.b16 %v161
    %v775 = vunpack.c.h.b16 %v161
    %v776 = vunpack.c.l.b16 %v162
    %v777 = vunpack.c.h.b16 %v162
    %v778 = vunpack.c.l.b16 %v163
    %v779 = vunpack.c.h.b16 %v163
    %v780 = vunpack.c.l.b16 %v164
    %v781 = vunpack.c.h.b16 %v164
    %v782 = vunpack.c.l.b16 %v165
    %v783 = vunpack.c.h.b16 %v165
    %v784 = vunpack.c.l.b16 %v166
    %v785 = vunpack.c.h.b16 %v166
    %v786 = vunpack.c.l.b16 %v167
    %v787 = vunpack.c.h.b16 %v167
    %v788 = vunpack.c.l.b16 %v168
    %v789 = vunpack.c.h.b16 %v168
    %v790 = vunpack.c.l.b16 %v169
    %v791 = vunpack.c.h.b16 %v169
    %v792 = vunpack.c.l.b16 %v170
    %v793 = vunpack.c.h.b16 %v170
    %v794 = vunpack.c.l.b16 %v171
    %v795 = vunpack.c.h.b16 %v171
    %v796 = vunpack.c.l.b16 %v172
    %v797 = vunpack.c.h.b16 %v172
    %v798 = vunpack.c.l.b16 %v173
    %v799 = vunpack.c.h.b16 %v173
    %v800 = vunpack.c.l.b16 %v174
    %v801 = vunpack.c.h.b16 %v174
    %v802 = vunpack.c.l.b16 %v175
    %v803 = vunpack.c.h.b16 %v175
    %v804 = vunpack.c.l.b16 %v176
    %v805 = vunpack.c.h.b16 %v176
    %v806 = vunpack.c.l.b16 %v177
    %v807 = vunpack.c.h.b16 %v177
    %v808 = vunpack.c.l.b16 %v178
    %v809 = vunpack.c.h.b16 %v178
    %v810 = vunpack.c.l.b16 %v179
    %v811 = vunpack.c.h.b16 %v179
    %v812 = vunpack.c.l.b16 %v180
    %v813 = vunpack.c.h.b16 %v180
    %v814 = vunpack.c.l.b16 %v181
    %v815 = vunpack.c.h.b16 %v181
    %v816 = vunpack.c.l.b16 %v182
    %v817 = vunpack.c.h.b16 %v182
    %v818 = vunpack.c.l.b16 %v183
    %v819 = vunpack.c.h.b16 %v183
    %v820 = vunpack.c.l.b16 %v184
    %v821 = vunpack.c.h.b16 %v184
    %v822 = vunpack.c.l.b16 %v185
    %v823 = vunpack.c.h.b16 %v185
    %v824 = vunpack.c.l.b16 %v186
    %v825 = vunpack.c.h.b16 %v186
    %v826 = vunpack.c.l.b16 %v187
    %v827 = vunpack.c.h.b16 %v187
    %v828 = vunpack.c.l.b16 %v188
    %v829 = vunpack.c.h.b16 %v188
    %v830 = vunpack.c.l.b16 %v189
    %v831 = vunpack.c.h.b16 %v189
    %v832 = vunpack.c.l.b16 %v190
    %v833 = vunpack.c.h.b16 %v190
    %v834 = vunpack.c.l.b16 %v191
    %v835 = vunpack.c.h.b16 %v191
    %v836 = vunpack.c.l.b16 %v192
    %v837 = vunpack.c.h.b16 %v192
    %v838 = vunpack.c.l.b16 %v193
    %v839 = vunpack.c.h.b16 %v193
    %v840 = vunpack.c.l.b16 %v194
    %v841 = vunpack.c.h.b16 %v194
    %v842 = vunpack.c.l.b16 %v195
    %v843 = vunpack.c.h.b16 %v195
    %v844 = vunpack.c.l.b16 %v196
    %v845 = vunpack.c.h.b16 %v196
    %v846 = vunpack.c.l.b16 %v197
    %v847 = vunpack.c.h.b16 %v197
    %v848 = vunpack.c.l.b16 %v198
    %v849 = vunpack.c.h.b16 %v198
    %v850 = vunpack.c.l.b16 %v199
    %v851 = vunpack.c.h.b16 %v199
    %v852 = vunpack.c.l.b16 %v200
    %v853 = vunpack.c.h.b16 %v200
    %v854 = vunpack.c.l.b16 %v201
    %v855 = vunpack.c.h.b16 %v201
    %v856 = vunpack.c.l.b16 %v202
    %v857 = vunpack.c.h.b16 %v202
    %v858 = vunpack.c.l.b16 %v203
    %v859 = vunpack.c.h.b16 %v203
    %v860 = vunpack.c.l.b16 %v204
    %v861 = vunpack.c.h.b16 %v204
    %v862 = vunpack.c.l.b16 %v205
    %v863 = vunpack.c.h.b16 %v205
    %v864 = vunpack.c.l.b16 %v206
    %v865 = vunpack.c.h.b16 %v206
    %v866 = vunpack.c.l.b16 %v207
    %v867 = vunpack.c.h.b16 %v207
    %v868 = vunpack.c.l.b16 %v208
    %v869 = vunpack.c.h.b16 %v208
    %v870 = vunpack.c.l.b16 %v209
    %v871 = vunpack.c.h.b16 %v209
    %v872 = vunpack.c.l.b16 %v210
    %v873 = vunpack.c.h.b16 %v210
    %v874 = vunpack.c.l.b16 %v211
    %v875 = vunpack.c.h.b16 %v211
    %v876 = vunpack.c.l.b16 %v212
    %v877 = vunpack.c.h.b16 %v212
    %v878 = vunpack.c.l.b16 %v213
    %v879 = vunpack.c.h.b16 %v213
    %v880 = vunpack.c.l.b16 %v214
    %v881 = vunpack.c.h.b16 %v214
    %v882 = vunpack.c.l.b16 %v215
    %v883 = vunpack.c.h.b16 %v215
    %v884 = vunpack.c.l.b16 %v216
    %v885 = vunpack.c.h.b16 %v216
    %v886 = vunpack.c.l.b16 %v217
    %v887 = vunpack.c.h.b16 %v217
    %v888 = vunpack.c.l.b16 %v218
    %v889 = vunpack.c.h.b16 %v218
    %v890 = vunpack.c.l.b16 %v219
    %v891 = vunpack.c.h.b16 %v219
    %v892 = vunpack.c.l.b16 %v220
    %v893 = vunpack.c.h.b16 %v220
    %v894 = vunpack.c.l.b16 %v221
    %v895 = vunpack.c.h.b16 %v221
    %v896 = vunpack.c.l.b16 %v222
    %v897 = vunpack.c.h.b16 %v222
    %v898 = vunpack.c.l.b16 %v223
    %v899 = vunpack.c.h.b16 %v223
    %v900 = vunpack.c.l.b16 %v224
    %v901 = vunpack.c.h.b16 %v224
    %v902 = vunpack.c.l.b16 %v225
    %v903 = vunpack.c.h.b16 %v225
    %v904 = vunpack.c.l.b16 %v226
    %v905 = vunpack.c.h.b16 %v226
    %v906 = vunpack.c.l.b16 %v227
    %v907 = vunpack.c.h.b16 %v227
    %v908 = vunpack.c.l.b16 %v228
    %v909 = vunpack.c.h.b16 %v228
    %v910 = vunpack.c.l.b16 %v229
    %v911 = vunpack.c.h.b16 %v229
    %v912 = vunpack.c.l.b16 %v230
    %v913 = vunpack.c.h.b16 %v230
    %v914 = vunpack.c.l.b16 %v231
    %v915 = vunpack.c.h.b16 %v231
    %v916 = vunpack.c.l.b16 %v232
    %v917 = vunpack.c.h.b16 %v232
    %v918 = vunpack.c.l.b16 %v233
    %v919 = vunpack.c.h.b16 %v233
    %v920 = vunpack.c.l.b16 %v234
    %v921 = vunpack.c.h.b16 %v234
    %v922 = vunpack.c.l.b16 %v235
    %v923 = vunpack.c.h.b16 %v235
    %v924 = vunpack.c.l.b16 %v236
    %v925 = vunpack.c.h.b16 %v236
    %v926 = vunpack.c.l.b16 %v237
    %v927 = vunpack.c.h.b16 %v237
    %v928 = vunpack.c.l.b16 %v238
    %v929 = vunpack.c.h.b16 %v238
    %v930 = vunpack.c.l.b16 %v239
    %v931 = vunpack.c.h.b16 %v239
    %v932 = vunpack.c.l.b16 %v240
    %v933 = vunpack.c.h.b16 %v240
    %v934 = vunpack.c.l.b16 %v241
    %v935 = vunpack.c.h.b16 %v241
    %v936 = vunpack.c.l.b16 %v242
    %v937 = vunpack.c.h.b16 %v242
    %v938 = vunpack.c.l.b16 %v243
    %v939 = vunpack.c.h.b16 %v243
    %v940 = vunpack.c.l.b16 %v244
    %v941 = vunpack.c.h.b16 %v244
    %v942 = vunpack.c.l.b16 %v245
    %v943 = vunpack.c.h.b16 %v245
    %v944 = vunpack.c.l.b16 %v246
    %v945 = vunpack.c.h.b16 %v246
    %v946 = vunpack.c.l.b16 %v247
    %v947 = vunpack.c.h.b16 %v247
    %v948 = vunpack.c.l.b16 %v248
    %v949 = vunpack.c.h.b16 %v248
    %v950 = vunpack.c.l.b16 %v249
    %v951 = vunpack.c.h.b16 %v249
    %v952 = vunpack.c.l.b16 %v250
    %v953 = vunpack.c.h.b16 %v250
    %v954 = vunpack.c.l.b16 %v251
    %v955 = vunpack.c.h.b16 %v251
    %v956 = vunpack.c.l.b16 %v252
    %v957 = vunpack.c.h.b16 %v252
    %v958 = vunpack.c.l.b16 %v253
    %v959 = vunpack.c.h.b16 %v253
    %v960 = vunpack.c.l.b16 %v254
    %v961 = vunpack.c.h.b16 %v254
    %v962 = vpack.c.b16 %v518, %v514
    %v963 = vpack.c.b16 %v519, %v515
    %v964 = vpack.c.b16 %v520, %v516
    %v965 = vpack.c.b16 %v521, %v517
    %v966 = vpack.c.b16 %v526, %v522
    %v967 = vpack.c.b16 %v527, %v523
    %v968 = vpack.c.b16 %v528, %v524
    %v969 = vpack.c.b16 %v529, %v525
    %v970 = vpack.c.b16 %v534, %v530
    %v971 = vpack.c.b16 %v535, %v531
    %v972 = vpack.c.b16 %v536, %v532
    %v973 = vpack.c.b16 %v537, %v533
    %v974 = vpack.c.b16 %v542, %v538
    %v975 = vpack.c.b16 %v543, %v539
    %v976 = vpack.c.b16 %v544, %v540
    %v977 = vpack.c.b16 %v545, %v541
    %v978 = vpack.c.b16 %v550, %v546
    %v979 = vpack.c.b16 %v551, %v547
    %v980 = vpack.c.b16 %v552, %v548
    %v981 = vpack.c.b16 %v553, %v549
    %v982 = vpack.c.b16 %v558, %v554
    %v983 = vpack.c.b16 %v559, %v555
    %v984 = vpack.c.b16 %v560, %v556
    %v985 = vpack.c.b16 %v561, %v557
    %v986 = vpack.c.b16 %v566, %v562
    %v987 = vpack.c.b16 %v567, %v563
    %v988 = vpack.c.b16 %v568, %v564
    %v989 = vpack.c.b16 %v569, %v565
    %v990 = vpack.c.b16 %v574, %v570
    %v991 = vpack.c.b16 %v575, %v571
    %v992 = vpack.c.b16 %v576, %v572
    %v993 = vpack.c.b16 %v577, %v573
    %v994 = vpack.c.b16 %v582, %v578
    %v995 = vpack.c.b16 %v583, %v579
    %v996 = vpack.c.b16 %v584, %v580
    %v997 = vpack.c.b16 %v585, %v581
    %v998 = vpack.c.b16 %v590, %v586
    %v999 = vpack.c.b16 %v591, %v587
    %v1000 = vpack.c.b16 %v592, %v588
    %v1001 = vpack.c.b16 %v593, %v589
    %v1002 = vpack.c.b16 %v598, %v594
    %v1003 = vpack.c.b16 %v599, %v595
    %v1004 = vpack.c.b16 %v600, %v596
    %v1005 = vpack.c.b16 %v601, %v597
    %v1006 = vpack.c.b16 %v606, %v602
    %v1007 = vpack.c.b16 %v607, %v603
    %v1008 = vpack.c.b16 %v608, %v604
    %v1009 = vpack.c.b16 %v609, %v605
    %v1010 = vpack.c.b16 %v614, %v610
    %v1011 = vpack.c.b16 %v615, %v611
    %v1012 = vpack.c.b16 %v616, %v612
    %v1013 = vpack.c.b16 %v617, %v613
    %v1014 = vpack.c.b16 %v622, %v618
    %v1015 = vpack.c.b16 %v623, %v619
    %v1016 = vpack.c.b16 %v624, %v620
    %v1017 = vpack.c.b16 %v625, %v621
    %v1018 = vpack.c.b16 %v630, %v626
    %v1019 = vpack.c.b16 %v631, %v627
    %v1020 = vpack.c.b16 %v632, %v628
    %v1021 = vpack.c.b16 %v633, %v629
    %v1022 = vpack.c.b16 %v638, %v634
    %v1023 = vpack.c.b16 %v639, %v635
    %v1024 = vpack.c.b16 %v640, %v636
    %v1025 = vpack.c.b16 %v641, %v637
    %v1026 = vpack.c.b16 %v646, %v642
    %v1027 = vpack.c.b16 %v647, %v643
    %v1028 = vpack.c.b16 %v648, %v644
    %v1029 = vpack.c.b16 %v649, %v645
    %v1030 = vpack.c.b16 %v654, %v650
    %v1031 = vpack.c.b16 %v655, %v651
    %v1032 = vpack.c.b16 %v656, %v652
    %v1033 = vpack.c.b16 %v657, %v653
    %v1034 = vpack.c.b16 %v662, %v658
    %v1035 = vpack.c.b16 %v663, %v659
    %v1036 = vpack.c.b16 %v664, %v660
    %v1037 = vpack.c.b16 %v665, %v661
    %v1038 = vpack.c.b16 %v670, %v666
    %v1039 = vpack.c.b16 %v671, %v667
    %v1040 = vpack.c.b16 %v672, %v668
    %v1041 = vpack.c.b16 %v673, %v669
    %v1042 = vpack.c.b16 %v678, %v674
    %v1043 = vpack.c.b16 %v679, %v675
    %v1044 = vpack.c.b16 %v680, %v676
    %v1045 = vpack.c.b16 %v681, %v677
    %v1046 = vpack.c.b16 %v686, %v682
    %v1047 = vpack.c.b16 %v687, %v683
    %v1048 = vpack.c.b16 %v688, %v684
    %v1049 = vpack.c.b16 %v689, %v685
    %v1050 = vpack.c.b16 %v694, %v690
    %v1051 = vpack.c.b16 %v695, %v691
    %v1052 = vpack.c.b16 %v696, %v692
    %v1053 = vpack.c.b16 %v697, %v693
    %v1054 = vpack.c.b16 %v702, %v698
    %v1055 = vpack.c.b16 %v703, %v699
    %v1056 = vpack.c.b16 %v704, %v700
    %v1057 = vpack.c.b16 %v705, %v701
    %v1058 = vpack.c.b16 %v710, %v706
    %v1059 = vpack.c.b16 %v711, %v707
    %v1060 = vpack.c.b16 %v712, %v708
    %v1061 = vpack.c.b16 %v713, %v709
    %v1062 = vpack.c.b16 %v718, %v714
    %v1063 = vpack.c.b16 %v719, %v715
    %v1064 = vpack.c.b16 %v720, %v716
    %v1065 = vpack.c.b16 %v721, %v717
    %v1066 = vpack.c.b16 %v726, %v722
    %v1067 = vpack.c.b16 %v727, %v723
    %v1068 = vpack.c.b16 %v728, %v724
    %v1069 = vpack.c.b16 %v729, %v725
    %v1070 = vpack.c.b16 %v734, %v730
    %v1071 = vpack.c.b16 %v735, %v731
    %v1072 = vpack.c.b16 %v736, %v732
    %v1073 = vpack.c.b16 %v737, %v733
    %v1074 = vpack.c.b16 %v742, %v738
    %v1075 = vpack.c.b16 %v743, %v739
    %v1076 = vpack.c.b16 %v744, %v740
    %v1077 = vpack.c.b16 %v745, %v741
    %v1078 = vpack.c.b16 %v750, %v746
    %v1079 = vpack.c.b16 %v751, %v747
    %v1080 = vpack.c.b16 %v752, %v748
    %v1081 = vpack.c.b16 %v753, %v749
    %v1082 = vpack.c.b16 %v758, %v754
    %v1083 = vpack.c.b16 %v759, %v755
    %v1084 = vpack.c.b16 %v760, %v756
    %v1085 = vpack.c.b16 %v761, %v757
    %v1086 = vpack.c.b16 %v766, %v762
    %v1087 = vpack.c.b16 %v767, %v763
    %v1088 = vpack.c.b16 %v768, %v764
    %v1089 = vpack.c.b16 %v769, %v765
    %v1090 = vpack.c.b16 %v774, %v770
    %v1091 = vpack.c.b16 %v775, %v771
    %v1092 = vpack.c.b16 %v776, %v772
    %v1093 = vpack.c.b16 %v777, %v773
    %v1094 = vpack.c.b16 %v782, %v778
    %v1095 = vpack.c.b16 %v783, %v779
    %v1096 = vpack.c.b16 %v784, %v780
    %v1097 = vpack.c.b16 %v785, %v781
    %v1098 = vpack.c.b16 %v790, %v786
    %v1099 = vpack.c.b16 %v791, %v787
    %v1100 = vpack.c.b16 %v792, %v788
    %v1101 = vpack.c.b16 %v793, %v789
    %v1102 = vpack.c.b16 %v798, %v794
    %v1103 = vpack.c.b16 %v799, %v795
    %v1104 = vpack.c.b16 %v800, %v796
    %v1105 = vpack.c.b16 %v801, %v797
    %v1106 = vpack.c.b16 %v806, %v802
    %v1107 = vpack.c.b16 %v807, %v803
    %v1108 = vpack.c.b16 %v808, %v804
    %v1109 = vpack.c.b16 %v809, %v805
    %v1110 = vpack.c.b16 %v814, %v810
    %v1111 = vpack.c.b16 %v815, %v811
    %v1112 = vpack.c.b16 %v816, %v812
    %v1113 = vpack.c.b16 %v817, %v813
    %v1114 = vpack.c.b16 %v822, %v818
    %v1115 = vpack.c.b16 %v823, %v819
    %v1116 = vpack.c.b16 %v824, %v820
    %v1117 = vpack.c.b16 %v825, %v821
    %v1118 = vpack.c.b16 %v830, %v826
    %v1119 = vpack.c.b16 %v831, %v827
    %v1120 = vpack.c.b16 %v832, %v828
    %v1121 = vpack.c.b16 %v833, %v829
    %v1122 = vpack.c.b16 %v838, %v834
    %v1123 = vpack.c.b16 %v839, %v835
    %v1124 = vpack.c.b16 %v840, %v836
    %v1125 = vpack.c.b16 %v841, %v837
    %v1126 = vpack.c.b16 %v846, %v842
    %v1127 = vpack.c.b16 %v847, %v843
    %v1128 = vpack.c.b16 %v848, %v844
    %v1129 = vpack.c.b16 %v849, %v845
    %v1130 = vpack.c.b16 %v854, %v850
    %v1131 = vpack.c.b16 %v855, %v851
    %v1132 = vpack.c.b16 %v856, %v852
    %v1133 = vpack.c.b16 %v857, %v853
    %v1134 = vpack.c.b16 %v862, %v858
    %v1135 = vpack.c.b16 %v863, %v859
    %v1136 = vpack.c.b16 %v864, %v860
    %v1137 = vpack.c.b16 %v865, %v861
    %v1138 = vpack.c.b16 %v870, %v866
    %v1139 = vpack.c.b16 %v871, %v867
    %v1140 = vpack.c.b16 %v872, %v868
    %v1141 = vpack.c.b16 %v873, %v869
    %v1142 = vpack.c.b16 %v878, %v874
    %v1143 = vpack.c.b16 %v879, %v875
    %v1144 = vpack.c.b16 %v880, %v876
    %v1145 = vpack.c.b16 %v881, %v877
    %v1146 = vpack.c.b16 %v886, %v882
    %v1147 = vpack.c.b16 %v887, %v883
    %v1148 = vpack.c.b16 %v888, %v884
    %v1149 = vpack.c.b16 %v889, %v885
    %v1150 = vpack.c.b16 %v894, %v890
    %v1151 = vpack.c.b16 %v895, %v891
    %v1152 = vpack.c.b16 %v896, %v892
    %v1153 = vpack.c.b16 %v897, %v893
    %v1154 = vpack.c.b16 %v902, %v898
    %v1155 = vpack.c.b16 %v903, %v899
    %v1156 = vpack.c.b16 %v904, %v900
    %v1157 = vpack.c.b16 %v905, %v901
    %v1158 = vpack.c.b16 %v910, %v906
    %v1159 = vpack.c.b16 %v911, %v907
    %v1160 = vpack.c.b16 %v912, %v908
    %v1161 = vpack.c.b16 %v913, %v909
    %v1162 = vpack.c.b16 %v918, %v914
    %v1163 = vpack.c.b16 %v919, %v915
    %v1164 = vpack.c.b16 %v920, %v916
    %v1165 = vpack.c.b16 %v921, %v917
    %v1166 = vpack.c.b16 %v926, %v922
    %v1167 = vpack.c.b16 %v927, %v923
    %v1168 = vpack.c.b16 %v928, %v924
    %v1169 = vpack.c.b16 %v929, %v925
    %v1170 = vpack.c.b16 %v934, %v930
    %v1171 = vpack.c.b16 %v935, %v931
    %v1172 = vpack.c.b16 %v936, %v932
    %v1173 = vpack.c.b16 %v937, %v933
    %v1174 = vpack.c.b16 %v942, %v938
    %v1175 = vpack.c.b16 %v943, %v939
    %v1176 = vpack.c.b16 %v944, %v940
    %v1177 = vpack.c.b16 %v945, %v941
    %v1178 = vpack.c.b16 %v950, %v946
    %v1179 = vpack.c.b16 %v951, %v947
    %v1180 = vpack.c.b16 %v952, %v948
    %v1181 = vpack.c.b16 %v953, %v949
    %v1182 = vpack.c.b16 %v958, %v954
    %v1183 = vpack.c.b16 %v959, %v955
    %v1184 = vpack.c.b16 %v960, %v956
    %v1185 = vpack.c.b16 %v961, %v957
    %1410 = vmatpush.bf16.msra.mxu0 %v990
    %1411 = vmatpush.bf16.msra.mxu0 %v986
    %1412 = vmatpush.bf16.msra.mxu0 %v982
    %1413 = vmatpush.bf16.msra.mxu0 %v978
    %1414 = vmatpush.bf16.msra.mxu0 %v974
    %1415 = vmatpush.bf16.msra.mxu0 %v970
    %1416 = vmatpush.bf16.msra.mxu0 %v966
    %1417 = vmatpush.bf16.msra.mxu0 %v962
    %1418 = vmatmul.bf16.gmra.mxu0 %v276
    %v1419 = vpop.f32.mrf.mxu0
    %v1420 = vadd.f32 %v257, %v1419
    %v1421 = vpop.f32.mrf.mxu0
    %1422 = vdwg.mxu0
    %1423 = vmatpush.bf16.msra.mxu0 %v1022
    %1424 = vmatpush.bf16.msra.mxu0 %v1018
    %1425 = vmatpush.bf16.msra.mxu0 %v1014
    %1426 = vmatpush.bf16.msra.mxu0 %v1010
    %1427 = vmatpush.bf16.msra.mxu0 %v1006
    %1428 = vmatpush.bf16.msra.mxu0 %v1002
    %1429 = vmatpush.bf16.msra.mxu0 %v998
    %1430 = vmatpush.bf16.msra.mxu0 %v994
    %1431 = vmatmul.bf16.gmra.mxu0 %v277
    %v1432 = vpop.f32.mrf.mxu0
    %v1433 = vadd.f32 %v1420, %v1432
    %v1434 = vpop.f32.mrf.mxu0
    %1435 = vdwg.mxu0
    %1436 = vmatpush.bf16.msra.mxu0 %v1054
    %1437 = vmatpush.bf16.msra.mxu0 %v1050
    %1438 = vmatpush.bf16.msra.mxu0 %v1046
    %1439 = vmatpush.bf16.msra.mxu0 %v1042
    %1440 = vmatpush.bf16.msra.mxu0 %v1038
    %1441 = vmatpush.bf16.msra.mxu0 %v1034
    %1442 = vmatpush.bf16.msra.mxu0 %v1030
    %1443 = vmatpush.bf16.msra.mxu0 %v1026
    %1444 = vmatmul.bf16.gmra.mxu0 %v278
    %v1445 = vpop.f32.mrf.mxu0
    %v1446 = vadd.f32 %v1433, %v1445
    %v1447 = vpop.f32.mrf.mxu0
    %1448 = vdwg.mxu0
    %1449 = vmatpush.bf16.msra.mxu0 %v1086
    %1450 = vmatpush.bf16.msra.mxu0 %v1082
    %1451 = vmatpush.bf16.msra.mxu0 %v1078
    %1452 = vmatpush.bf16.msra.mxu0 %v1074
    %1453 = vmatpush.bf16.msra.mxu0 %v1070
    %1454 = vmatpush.bf16.msra.mxu0 %v1066
    %1455 = vmatpush.bf16.msra.mxu0 %v1062
    %1456 = vmatpush.bf16.msra.mxu0 %v1058
    %1457 = vmatmul.bf16.gmra.mxu0 %v279
    %v1458 = vpop.f32.mrf.mxu0
    %v1459 = vadd.f32 %v1446, %v1458
    %v1460 = vpop.f32.mrf.mxu0
    %1461 = vdwg.mxu0
    %1462 = vmatpush.bf16.msra.mxu0 %v1118
    %1463 = vmatpush.bf16.msra.mxu0 %v1114
    %1464 = vmatpush.bf16.msra.mxu0 %v1110
    %1465 = vmatpush.bf16.msra.mxu0 %v1106
    %1466 = vmatpush.bf16.msra.mxu0 %v1102
    %1467 = vmatpush.bf16.msra.mxu0 %v1098
    %1468 = vmatpush.bf16.msra.mxu0 %v1094
    %1469 = vmatpush.bf16.msra.mxu0 %v1090
    %1470 = vmatmul.bf16.gmra.mxu0 %v280
    %v1471 = vpop.f32.mrf.mxu0
    %v1472 = vadd.f32 %v1459, %v1471
    %v1473 = vpop.f32.mrf.mxu0
    %1474 = vdwg.mxu0
    %1475 = vmatpush.bf16.msra.mxu0 %v1150
    %1476 = vmatpush.bf16.msra.mxu0 %v1146
    %1477 = vmatpush.bf16.msra.mxu0 %v1142
    %1478 = vmatpush.bf16.msra.mxu0 %v1138
    %1479 = vmatpush.bf16.msra.mxu0 %v1134
    %1480 = vmatpush.bf16.msra.mxu0 %v1130
    %1481 = vmatpush.bf16.msra.mxu0 %v1126
    %1482 = vmatpush.bf16.msra.mxu0 %v1122
    %1483 = vmatmul.bf16.gmra.mxu0 %v281
    %v1484 = vpop.f32.mrf.mxu0
    %v1485 = vadd.f32 %v1472, %v1484
    %v1486 = vpop.f32.mrf.mxu0
    %1487 = vdwg.mxu0
    %1488 = vmatpush.bf16.msra.mxu0 %v1182
    %1489 = vmatpush.bf16.msra.mxu0 %v1178
    %1490 = vmatpush.bf16.msra.mxu0 %v1174
    %1491 = vmatpush.bf16.msra.mxu0 %v1170
    %1492 = vmatpush.bf16.msra.mxu0 %v1166
    %1493 = vmatpush.bf16.msra.mxu0 %v1162
    %1494 = vmatpush.bf16.msra.mxu0 %v1158
    %1495 = vmatpush.bf16.msra.mxu0 %v1154
    %1496 = vmatmul.bf16.gmra.mxu0 %v282
    %v1497 = vpop.f32.mrf.mxu0
    %v1498 = vadd.f32 %v1485, %v1497
    %v1499 = vpop.f32.mrf.mxu0
    %1500 = vdwg.mxu0
    %1501 = vmatpush.bf16.msra.mxu0 %v991
    %1502 = vmatpush.bf16.msra.mxu0 %v987
    %1503 = vmatpush.bf16.msra.mxu0 %v983
    %1504 = vmatpush.bf16.msra.mxu0 %v979
    %1505 = vmatpush.bf16.msra.mxu0 %v975
    %1506 = vmatpush.bf16.msra.mxu0 %v971
    %1507 = vmatpush.bf16.msra.mxu0 %v967
    %1508 = vmatpush.bf16.msra.mxu0 %v963
    %1509 = vmatmul.bf16.gmra.mxu0 %v276
    %v1510 = vpop.f32.mrf.mxu0
    %v1511 = vadd.f32 %v258, %v1510
    %v1512 = vpop.f32.mrf.mxu0
    %1513 = vdwg.mxu0
    %1514 = vmatpush.bf16.msra.mxu0 %v1023
    %1515 = vmatpush.bf16.msra.mxu0 %v1019
    %1516 = vmatpush.bf16.msra.mxu0 %v1015
    %1517 = vmatpush.bf16.msra.mxu0 %v1011
    %1518 = vmatpush.bf16.msra.mxu0 %v1007
    %1519 = vmatpush.bf16.msra.mxu0 %v1003
    %1520 = vmatpush.bf16.msra.mxu0 %v999
    %1521 = vmatpush.bf16.msra.mxu0 %v995
    %1522 = vmatmul.bf16.gmra.mxu0 %v277
    %v1523 = vpop.f32.mrf.mxu0
    %v1524 = vadd.f32 %v1511, %v1523
    %v1525 = vpop.f32.mrf.mxu0
    %1526 = vdwg.mxu0
    %1527 = vmatpush.bf16.msra.mxu0 %v1055
    %1528 = vmatpush.bf16.msra.mxu0 %v1051
    %1529 = vmatpush.bf16.msra.mxu0 %v1047
    %1530 = vmatpush.bf16.msra.mxu0 %v1043
    %1531 = vmatpush.bf16.msra.mxu0 %v1039
    %1532 = vmatpush.bf16.msra.mxu0 %v1035
    %1533 = vmatpush.bf16.msra.mxu0 %v1031
    %1534 = vmatpush.bf16.msra.mxu0 %v1027
    %1535 = vmatmul.bf16.gmra.mxu0 %v278
    %v1536 = vpop.f32.mrf.mxu0
    %v1537 = vadd.f32 %v1524, %v1536
    %v1538 = vpop.f32.mrf.mxu0
    %1539 = vdwg.mxu0
    %1540 = vmatpush.bf16.msra.mxu0 %v1087
    %1541 = vmatpush.bf16.msra.mxu0 %v1083
    %1542 = vmatpush.bf16.msra.mxu0 %v1079
    %1543 = vmatpush.bf16.msra.mxu0 %v1075
    %1544 = vmatpush.bf16.msra.mxu0 %v1071
    %1545 = vmatpush.bf16.msra.mxu0 %v1067
    %1546 = vmatpush.bf16.msra.mxu0 %v1063
    %1547 = vmatpush.bf16.msra.mxu0 %v1059
    %1548 = vmatmul.bf16.gmra.mxu0 %v279
    %v1549 = vpop.f32.mrf.mxu0
    %v1550 = vadd.f32 %v1537, %v1549
    %v1551 = vpop.f32.mrf.mxu0
    %1552 = vdwg.mxu0
    %1553 = vmatpush.bf16.msra.mxu0 %v1119
    %1554 = vmatpush.bf16.msra.mxu0 %v1115
    %1555 = vmatpush.bf16.msra.mxu0 %v1111
    %1556 = vmatpush.bf16.msra.mxu0 %v1107
    %1557 = vmatpush.bf16.msra.mxu0 %v1103
    %1558 = vmatpush.bf16.msra.mxu0 %v1099
    %1559 = vmatpush.bf16.msra.mxu0 %v1095
    %1560 = vmatpush.bf16.msra.mxu0 %v1091
    %1561 = vmatmul.bf16.gmra.mxu0 %v280
    %v1562 = vpop.f32.mrf.mxu0
    %v1563 = vadd.f32 %v1550, %v1562
    %v1564 = vpop.f32.mrf.mxu0
    %1565 = vdwg.mxu0
    %1566 = vmatpush.bf16.msra.mxu0 %v1151
    %1567 = vmatpush.bf16.msra.mxu0 %v1147
    %1568 = vmatpush.bf16.msra.mxu0 %v1143
    %1569 = vmatpush.bf16.msra.mxu0 %v1139
    %1570 = vmatpush.bf16.msra.mxu0 %v1135
    %1571 = vmatpush.bf16.msra.mxu0 %v1131
    %1572 = vmatpush.bf16.msra.mxu0 %v1127
    %1573 = vmatpush.bf16.msra.mxu0 %v1123
    %1574 = vmatmul.bf16.gmra.mxu0 %v281
    %v1575 = vpop.f32.mrf.mxu0
    %v1576 = vadd.f32 %v1563, %v1575
    %v1577 = vpop.f32.mrf.mxu0
    %1578 = vdwg.mxu0
    %1579 = vmatpush.bf16.msra.mxu0 %v1183
    %1580 = vmatpush.bf16.msra.mxu0 %v1179
    %1581 = vmatpush.bf16.msra.mxu0 %v1175
    %1582 = vmatpush.bf16.msra.mxu0 %v1171
    %1583 = vmatpush.bf16.msra.mxu0 %v1167
    %1584 = vmatpush.bf16.msra.mxu0 %v1163
    %1585 = vmatpush.bf16.msra.mxu0 %v1159
    %1586 = vmatpush.bf16.msra.mxu0 %v1155
    %1587 = vmatmul.bf16.gmra.mxu0 %v282
    %v1588 = vpop.f32.mrf.mxu0
    %v1589 = vadd.f32 %v1576, %v1588
    %v1590 = vpop.f32.mrf.mxu0
    %1591 = vdwg.mxu0
    %1592 = vmatpush.bf16.msra.mxu0 %v992
    %1593 = vmatpush.bf16.msra.mxu0 %v988
    %1594 = vmatpush.bf16.msra.mxu0 %v984
    %1595 = vmatpush.bf16.msra.mxu0 %v980
    %1596 = vmatpush.bf16.msra.mxu0 %v976
    %1597 = vmatpush.bf16.msra.mxu0 %v972
    %1598 = vmatpush.bf16.msra.mxu0 %v968
    %1599 = vmatpush.bf16.msra.mxu0 %v964
    %1600 = vmatmul.bf16.gmra.mxu0 %v276
    %v1601 = vpop.f32.mrf.mxu0
    %v1602 = vadd.f32 %v259, %v1601
    %v1603 = vpop.f32.mrf.mxu0
    %1604 = vdwg.mxu0
    %1605 = vmatpush.bf16.msra.mxu0 %v1024
    %1606 = vmatpush.bf16.msra.mxu0 %v1020
    %1607 = vmatpush.bf16.msra.mxu0 %v1016
    %1608 = vmatpush.bf16.msra.mxu0 %v1012
    %1609 = vmatpush.bf16.msra.mxu0 %v1008
    %1610 = vmatpush.bf16.msra.mxu0 %v1004
    %1611 = vmatpush.bf16.msra.mxu0 %v1000
    %1612 = vmatpush.bf16.msra.mxu0 %v996
    %1613 = vmatmul.bf16.gmra.mxu0 %v277
    %v1614 = vpop.f32.mrf.mxu0
    %v1615 = vadd.f32 %v1602, %v1614
    %v1616 = vpop.f32.mrf.mxu0
    %1617 = vdwg.mxu0
    %1618 = vmatpush.bf16.msra.mxu0 %v1056
    %1619 = vmatpush.bf16.msra.mxu0 %v1052
    %1620 = vmatpush.bf16.msra.mxu0 %v1048
    %1621 = vmatpush.bf16.msra.mxu0 %v1044
    %1622 = vmatpush.bf16.msra.mxu0 %v1040
    %1623 = vmatpush.bf16.msra.mxu0 %v1036
    %1624 = vmatpush.bf16.msra.mxu0 %v1032
    %1625 = vmatpush.bf16.msra.mxu0 %v1028
    %1626 = vmatmul.bf16.gmra.mxu0 %v278
    %v1627 = vpop.f32.mrf.mxu0
    %v1628 = vadd.f32 %v1615, %v1627
    %v1629 = vpop.f32.mrf.mxu0
    %1630 = vdwg.mxu0
    %1631 = vmatpush.bf16.msra.mxu0 %v1088
    %1632 = vmatpush.bf16.msra.mxu0 %v1084
    %1633 = vmatpush.bf16.msra.mxu0 %v1080
    %1634 = vmatpush.bf16.msra.mxu0 %v1076
    %1635 = vmatpush.bf16.msra.mxu0 %v1072
    %1636 = vmatpush.bf16.msra.mxu0 %v1068
    %1637 = vmatpush.bf16.msra.mxu0 %v1064
    %1638 = vmatpush.bf16.msra.mxu0 %v1060
    %1639 = vmatmul.bf16.gmra.mxu0 %v279
    %v1640 = vpop.f32.mrf.mxu0
    %v1641 = vadd.f32 %v1628, %v1640
    %v1642 = vpop.f32.mrf.mxu0
    %1643 = vdwg.mxu0
    %1644 = vmatpush.bf16.msra.mxu0 %v1120
    %1645 = vmatpush.bf16.msra.mxu0 %v1116
    %1646 = vmatpush.bf16.msra.mxu0 %v1112
    %1647 = vmatpush.bf16.msra.mxu0 %v1108
    %1648 = vmatpush.bf16.msra.mxu0 %v1104
    %1649 = vmatpush.bf16.msra.mxu0 %v1100
    %1650 = vmatpush.bf16.msra.mxu0 %v1096
    %1651 = vmatpush.bf16.msra.mxu0 %v1092
    %1652 = vmatmul.bf16.gmra.mxu0 %v280
    %v1653 = vpop.f32.mrf.mxu0
    %v1654 = vadd.f32 %v1641, %v1653
    %v1655 = vpop.f32.mrf.mxu0
    %1656 = vdwg.mxu0
    %1657 = vmatpush.bf16.msra.mxu0 %v1152
    %1658 = vmatpush.bf16.msra.mxu0 %v1148
    %1659 = vmatpush.bf16.msra.mxu0 %v1144
    %1660 = vmatpush.bf16.msra.mxu0 %v1140
    %1661 = vmatpush.bf16.msra.mxu0 %v1136
    %1662 = vmatpush.bf16.msra.mxu0 %v1132
    %1663 = vmatpush.bf16.msra.mxu0 %v1128
    %1664 = vmatpush.bf16.msra.mxu0 %v1124
    %1665 = vmatmul.bf16.gmra.mxu0 %v281
    %v1666 = vpop.f32.mrf.mxu0
    %v1667 = vadd.f32 %v1654, %v1666
    %v1668 = vpop.f32.mrf.mxu0
    %1669 = vdwg.mxu0
    %1670 = vmatpush.bf16.msra.mxu0 %v1184
    %1671 = vmatpush.bf16.msra.mxu0 %v1180
    %1672 = vmatpush.bf16.msra.mxu0 %v1176
    %1673 = vmatpush.bf16.msra.mxu0 %v1172
    %1674 = vmatpush.bf16.msra.mxu0 %v1168
    %1675 = vmatpush.bf16.msra.mxu0 %v1164
    %1676 = vmatpush.bf16.msra.mxu0 %v1160
    %1677 = vmatpush.bf16.msra.mxu0 %v1156
    %1678 = vmatmul.bf16.gmra.mxu0 %v282
    %v1679 = vpop.f32.mrf.mxu0
    %v1680 = vadd.f32 %v1667, %v1679
    %v1681 = vpop.f32.mrf.mxu0
    %1682 = vdwg.mxu0
    %1683 = vmatpush.bf16.msra.mxu0 %v993
    %1684 = vmatpush.bf16.msra.mxu0 %v989
    %1685 = vmatpush.bf16.msra.mxu0 %v985
    %1686 = vmatpush.bf16.msra.mxu0 %v981
    %1687 = vmatpush.bf16.msra.mxu0 %v977
    %1688 = vmatpush.bf16.msra.mxu0 %v973
    %1689 = vmatpush.bf16.msra.mxu0 %v969
    %1690 = vmatpush.bf16.msra.mxu0 %v965
    %1691 = vmatmul.bf16.gmra.mxu0 %v276
    %v1692 = vpop.f32.mrf.mxu0
    %v1693 = vadd.f32 %v260, %v1692
    %v1694 = vpop.f32.mrf.mxu0
    %1695 = vdwg.mxu0
    %1696 = vmatpush.bf16.msra.mxu0 %v1025
    %1697 = vmatpush.bf16.msra.mxu0 %v1021
    %1698 = vmatpush.bf16.msra.mxu0 %v1017
    %1699 = vmatpush.bf16.msra.mxu0 %v1013
    %1700 = vmatpush.bf16.msra.mxu0 %v1009
    %1701 = vmatpush.bf16.msra.mxu0 %v1005
    %1702 = vmatpush.bf16.msra.mxu0 %v1001
    %1703 = vmatpush.bf16.msra.mxu0 %v997
    %1704 = vmatmul.bf16.gmra.mxu0 %v277
    %v1705 = vpop.f32.mrf.mxu0
    %v1706 = vadd.f32 %v1693, %v1705
    %v1707 = vpop.f32.mrf.mxu0
    %1708 = vdwg.mxu0
    %1709 = vmatpush.bf16.msra.mxu0 %v1057
    %1710 = vmatpush.bf16.msra.mxu0 %v1053
    %1711 = vmatpush.bf16.msra.mxu0 %v1049
    %1712 = vmatpush.bf16.msra.mxu0 %v1045
    %1713 = vmatpush.bf16.msra.mxu0 %v1041
    %1714 = vmatpush.bf16.msra.mxu0 %v1037
    %1715 = vmatpush.bf16.msra.mxu0 %v1033
    %1716 = vmatpush.bf16.msra.mxu0 %v1029
    %1717 = vmatmul.bf16.gmra.mxu0 %v278
    %v1718 = vpop.f32.mrf.mxu0
    %v1719 = vadd.f32 %v1706, %v1718
    %v1720 = vpop.f32.mrf.mxu0
    %1721 = vdwg.mxu0
    %1722 = vmatpush.bf16.msra.mxu0 %v1089
    %1723 = vmatpush.bf16.msra.mxu0 %v1085
    %1724 = vmatpush.bf16.msra.mxu0 %v1081
    %1725 = vmatpush.bf16.msra.mxu0 %v1077
    %1726 = vmatpush.bf16.msra.mxu0 %v1073
    %1727 = vmatpush.bf16.msra.mxu0 %v1069
    %1728 = vmatpush.bf16.msra.mxu0 %v1065
    %1729 = vmatpush.bf16.msra.mxu0 %v1061
    %1730 = vmatmul.bf16.gmra.mxu0 %v279
    %v1731 = vpop.f32.mrf.mxu0
    %v1732 = vadd.f32 %v1719, %v1731
    %v1733 = vpop.f32.mrf.mxu0
    %1734 = vdwg.mxu0
    %1735 = vmatpush.bf16.msra.mxu0 %v1121
    %1736 = vmatpush.bf16.msra.mxu0 %v1117
    %1737 = vmatpush.bf16.msra.mxu0 %v1113
    %1738 = vmatpush.bf16.msra.mxu0 %v1109
    %1739 = vmatpush.bf16.msra.mxu0 %v1105
    %1740 = vmatpush.bf16.msra.mxu0 %v1101
    %1741 = vmatpush.bf16.msra.mxu0 %v1097
    %1742 = vmatpush.bf16.msra.mxu0 %v1093
    %1743 = vmatmul.bf16.gmra.mxu0 %v280
    %v1744 = vpop.f32.mrf.mxu0
    %v1745 = vadd.f32 %v1732, %v1744
    %v1746 = vpop.f32.mrf.mxu0
    %1747 = vdwg.mxu0
    %1748 = vmatpush.bf16.msra.mxu0 %v1153
    %1749 = vmatpush.bf16.msra.mxu0 %v1149
    %1750 = vmatpush.bf16.msra.mxu0 %v1145
    %1751 = vmatpush.bf16.msra.mxu0 %v1141
    %1752 = vmatpush.bf16.msra.mxu0 %v1137
    %1753 = vmatpush.bf16.msra.mxu0 %v1133
    %1754 = vmatpush.bf16.msra.mxu0 %v1129
    %1755 = vmatpush.bf16.msra.mxu0 %v1125
    %1756 = vmatmul.bf16.gmra.mxu0 %v281
    %v1757 = vpop.f32.mrf.mxu0
    %v1758 = vadd.f32 %v1745, %v1757
    %v1759 = vpop.f32.mrf.mxu0
    %1760 = vdwg.mxu0
    %1761 = vmatpush.bf16.msra.mxu0 %v1185
    %1762 = vmatpush.bf16.msra.mxu0 %v1181
    %1763 = vmatpush.bf16.msra.mxu0 %v1177
    %1764 = vmatpush.bf16.msra.mxu0 %v1173
    %1765 = vmatpush.bf16.msra.mxu0 %v1169
    %1766 = vmatpush.bf16.msra.mxu0 %v1165
    %1767 = vmatpush.bf16.msra.mxu0 %v1161
    %1768 = vmatpush.bf16.msra.mxu0 %v1157
    %1769 = vmatmul.bf16.gmra.mxu0 %v282
    %v1770 = vpop.f32.mrf.mxu0
    %v1771 = vadd.f32 %v1758, %v1770
    %v1772 = vpop.f32.mrf.mxu0
    %1773 = vdwg.mxu0
    %v1774 = vmax.f32 %v1498, 0.0
    %v1775 = vmax.f32 %v1589, 0.0
    %v1776 = vmax.f32 %v1680, 0.0
    %v1777 = vmax.f32 %v1771, 0.0
    %v1778 = vpack.c.bf16 %v1774, %v1774
    %v1779 = vpack.c.bf16 %v1775, %v1775
    %v1780 = vpack.c.bf16 %v1776, %v1776
    %v1781 = vpack.c.bf16 %v1777, %v1777
    %v1782 = vld [vmem:[%s3] sm:$0xf]
    %v1783 = vld [vmem:[%s3 + $0x4] sm:$0xf]
    %v1784 = vld [vmem:[%s3 + $0x8] sm:$0xf]
    %v1785 = vld [vmem:[%s3 + $0xc] sm:$0xf]
    %v1786 = vld [vmem:[%s3 + $0x10] sm:$0xf]
    %v1787 = vld [vmem:[%s3 + $0x14] sm:$0xf]
    %v1788 = vld [vmem:[%s3 + $0x18] sm:$0xf]
    %v1789 = vld [vmem:[%s3 + $0x1c] sm:$0xf]
    %v1790 = vld [vmem:[%s3 + $0x20] sm:$0xf]
    %v1791 = vld [vmem:[%s3 + $0x24] sm:$0xf]
    %v1792 = vld [vmem:[%s3 + $0x28] sm:$0xf]
    %v1793 = vld [vmem:[%s3 + $0x2c] sm:$0xf]
    %v1794 = vld [vmem:[%s3 + $0x30] sm:$0xf]
    %v1795 = vld [vmem:[%s3 + $0x34] sm:$0xf]
    %v1796 = vld [vmem:[%s3 + $0x38] sm:$0xf]
    %v1797 = vld [vmem:[%s3 + $0x3c] sm:$0xf]
    %v1798 = vld [vmem:[%s3 + $0x40] sm:$0xf]
    %v1799 = vld [vmem:[%s3 + $0x44] sm:$0xf]
    %v1800 = vld [vmem:[%s3 + $0x48] sm:$0xf]
    %v1801 = vld [vmem:[%s3 + $0x4c] sm:$0xf]
    %v1802 = vld [vmem:[%s3 + $0x50] sm:$0xf]
    %v1803 = vld [vmem:[%s3 + $0x54] sm:$0xf]
    %v1804 = vld [vmem:[%s3 + $0x58] sm:$0xf]
    %v1805 = vld [vmem:[%s3 + $0x5c] sm:$0xf]
    %v1806 = vld [vmem:[%s3 + $0x60] sm:$0xf]
    %v1807 = vld [vmem:[%s3 + $0x64] sm:$0xf]
    %v1808 = vld [vmem:[%s3 + $0x68] sm:$0xf]
    %v1809 = vld [vmem:[%s3 + $0x6c] sm:$0xf]
    %v1810 = vld [vmem:[%s3 + $0x70] sm:$0xf]
    %v1811 = vld [vmem:[%s3 + $0x74] sm:$0xf]
    %v1812 = vld [vmem:[%s3 + $0x78] sm:$0xf]
    %v1813 = vld [vmem:[%s3 + $0x7c] sm:$0xf]
    %v1814 = vld [vmem:[%s3 + $0x80] sm:$0xf]
    %v1815 = vld [vmem:[%s3 + $0x84] sm:$0xf]
    %v1816 = vld [vmem:[%s3 + $0x88] sm:$0xf]
    %v1817 = vld [vmem:[%s3 + $0x8c] sm:$0xf]
    %v1818 = vld [vmem:[%s3 + $0x90] sm:$0xf]
    %v1819 = vld [vmem:[%s3 + $0x94] sm:$0xf]
    %v1820 = vld [vmem:[%s3 + $0x98] sm:$0xf]
    %v1821 = vld [vmem:[%s3 + $0x9c] sm:$0xf]
    %v1822 = vld [vmem:[%s3 + $0xa0] sm:$0xf]
    %v1823 = vld [vmem:[%s3 + $0xa4] sm:$0xf]
    %v1824 = vld [vmem:[%s3 + $0xa8] sm:$0xf]
    %v1825 = vld [vmem:[%s3 + $0xac] sm:$0xf]
    %v1826 = vld [vmem:[%s3 + $0xb0] sm:$0xf]
    %v1827 = vld [vmem:[%s3 + $0xb4] sm:$0xf]
    %v1828 = vld [vmem:[%s3 + $0xb8] sm:$0xf]
    %v1829 = vld [vmem:[%s3 + $0xbc] sm:$0xf]
    %v1830 = vld [vmem:[%s3 + $0xc0] sm:$0xf]
    %v1831 = vld [vmem:[%s3 + $0xc4] sm:$0xf]
    %v1832 = vld [vmem:[%s3 + $0xc8] sm:$0xf]
    %v1833 = vld [vmem:[%s3 + $0xcc] sm:$0xf]
    %v1834 = vld [vmem:[%s3 + $0xd0] sm:$0xf]
    %v1835 = vld [vmem:[%s3 + $0xd4] sm:$0xf]
    %v1836 = vld [vmem:[%s3 + $0xd8] sm:$0xf]
    %v1837 = vld [vmem:[%s3 + $0xdc] sm:$0xf]
    %v1838 = vld [vmem:[%s3 + $0xe0] sm:$0xf]
    %v1839 = vld [vmem:[%s3 + $0xe4] sm:$0xf]
    %v1840 = vld [vmem:[%s3 + $0xe8] sm:$0xf]
    %v1841 = vld [vmem:[%s3 + $0xec] sm:$0xf]
    %v1842 = vld [vmem:[%s3 + $0xf0] sm:$0xf]
    %v1843 = vld [vmem:[%s3 + $0xf4] sm:$0xf]
    %v1844 = vld [vmem:[%s3 + $0xf8] sm:$0xf]
    %v1845 = vld [vmem:[%s3 + $0xfc] sm:$0xf]
    %v1846 = vld [vmem:[%s4] sm:$0x1]
    %v1848 = vperm.slane %v1846, 0
    %v1914 = vunpack.c.l.b16 %v1782
    %v1915 = vunpack.c.l.b16 %v1783
    %v1916 = vunpack.c.l.b16 %v1784
    %v1917 = vunpack.c.l.b16 %v1785
    %v1918 = vunpack.c.l.b16 %v1786
    %v1919 = vunpack.c.l.b16 %v1787
    %v1920 = vunpack.c.l.b16 %v1788
    %v1921 = vunpack.c.l.b16 %v1789
    %v1922 = vunpack.c.l.b16 %v1790
    %v1923 = vunpack.c.l.b16 %v1791
    %v1924 = vunpack.c.l.b16 %v1792
    %v1925 = vunpack.c.l.b16 %v1793
    %v1926 = vunpack.c.l.b16 %v1794
    %v1927 = vunpack.c.l.b16 %v1795
    %v1928 = vunpack.c.l.b16 %v1796
    %v1929 = vunpack.c.l.b16 %v1797
    %v1930 = vunpack.c.l.b16 %v1798
    %v1931 = vunpack.c.l.b16 %v1799
    %v1932 = vunpack.c.l.b16 %v1800
    %v1933 = vunpack.c.l.b16 %v1801
    %v1934 = vunpack.c.l.b16 %v1802
    %v1935 = vunpack.c.l.b16 %v1803
    %v1936 = vunpack.c.l.b16 %v1804
    %v1937 = vunpack.c.l.b16 %v1805
    %v1938 = vunpack.c.l.b16 %v1806
    %v1939 = vunpack.c.l.b16 %v1807
    %v1940 = vunpack.c.l.b16 %v1808
    %v1941 = vunpack.c.l.b16 %v1809
    %v1942 = vunpack.c.l.b16 %v1810
    %v1943 = vunpack.c.l.b16 %v1811
    %v1944 = vunpack.c.l.b16 %v1812
    %v1945 = vunpack.c.l.b16 %v1813
    %v1946 = vunpack.c.l.b16 %v1814
    %v1947 = vunpack.c.l.b16 %v1815
    %v1948 = vunpack.c.l.b16 %v1816
    %v1949 = vunpack.c.l.b16 %v1817
    %v1950 = vunpack.c.l.b16 %v1818
    %v1951 = vunpack.c.l.b16 %v1819
    %v1952 = vunpack.c.l.b16 %v1820
    %v1953 = vunpack.c.l.b16 %v1821
    %v1954 = vunpack.c.l.b16 %v1822
    %v1955 = vunpack.c.l.b16 %v1823
    %v1956 = vunpack.c.l.b16 %v1824
    %v1957 = vunpack.c.l.b16 %v1825
    %v1958 = vunpack.c.l.b16 %v1826
    %v1959 = vunpack.c.l.b16 %v1827
    %v1960 = vunpack.c.l.b16 %v1828
    %v1961 = vunpack.c.l.b16 %v1829
    %v1962 = vunpack.c.l.b16 %v1830
    %v1963 = vunpack.c.l.b16 %v1831
    %v1964 = vunpack.c.l.b16 %v1832
    %v1965 = vunpack.c.l.b16 %v1833
    %v1966 = vunpack.c.l.b16 %v1834
    %v1967 = vunpack.c.l.b16 %v1835
    %v1968 = vunpack.c.l.b16 %v1836
    %v1969 = vunpack.c.l.b16 %v1837
    %v1970 = vunpack.c.l.b16 %v1838
    %v1971 = vunpack.c.l.b16 %v1839
    %v1972 = vunpack.c.l.b16 %v1840
    %v1973 = vunpack.c.l.b16 %v1841
    %v1974 = vunpack.c.l.b16 %v1842
    %v1975 = vunpack.c.l.b16 %v1843
    %v1976 = vunpack.c.l.b16 %v1844
    %v1977 = vunpack.c.l.b16 %v1845
    %v1978 = vpack.c.b16 %v1915, %v1914
    %v1979 = vpack.c.b16 %v1917, %v1916
    %v1980 = vpack.c.b16 %v1919, %v1918
    %v1981 = vpack.c.b16 %v1921, %v1920
    %v1982 = vpack.c.b16 %v1923, %v1922
    %v1983 = vpack.c.b16 %v1925, %v1924
    %v1984 = vpack.c.b16 %v1927, %v1926
    %v1985 = vpack.c.b16 %v1929, %v1928
    %v1986 = vpack.c.b16 %v1931, %v1930
    %v1987 = vpack.c.b16 %v1933, %v1932
    %v1988 = vpack.c.b16 %v1935, %v1934
    %v1989 = vpack.c.b16 %v1937, %v1936
    %v1990 = vpack.c.b16 %v1939, %v1938
    %v1991 = vpack.c.b16 %v1941, %v1940
    %v1992 = vpack.c.b16 %v1943, %v1942
    %v1993 = vpack.c.b16 %v1945, %v1944
    %v1994 = vpack.c.b16 %v1947, %v1946
    %v1995 = vpack.c.b16 %v1949, %v1948
    %v1996 = vpack.c.b16 %v1951, %v1950
    %v1997 = vpack.c.b16 %v1953, %v1952
    %v1998 = vpack.c.b16 %v1955, %v1954
    %v1999 = vpack.c.b16 %v1957, %v1956
    %v2000 = vpack.c.b16 %v1959, %v1958
    %v2001 = vpack.c.b16 %v1961, %v1960
    %v2002 = vpack.c.b16 %v1963, %v1962
    %v2003 = vpack.c.b16 %v1965, %v1964
    %v2004 = vpack.c.b16 %v1967, %v1966
    %v2005 = vpack.c.b16 %v1969, %v1968
    %v2006 = vpack.c.b16 %v1971, %v1970
    %v2007 = vpack.c.b16 %v1973, %v1972
    %v2008 = vpack.c.b16 %v1975, %v1974
    %v2009 = vpack.c.b16 %v1977, %v1976
    %2042 = vmatpush.bf16.msra.mxu0 %v1985
    %2043 = vmatpush.bf16.msra.mxu0 %v1984
    %2044 = vmatpush.bf16.msra.mxu0 %v1983
    %2045 = vmatpush.bf16.msra.mxu0 %v1982
    %2046 = vmatpush.bf16.msra.mxu0 %v1981
    %2047 = vmatpush.bf16.msra.mxu0 %v1980
    %2048 = vmatpush.bf16.msra.mxu0 %v1979
    %2049 = vmatpush.bf16.msra.mxu0 %v1978
    %2050 = vmatmul.bf16.gmra.mxu0 %v1778
    %v2051 = vpop.f32.mrf.mxu0
    %v2052 = vadd.f32 %v1848, %v2051
    %v2053 = vpop.f32.mrf.mxu0
    %2054 = vdwg.mxu0
    %2055 = vmatpush.bf16.msra.mxu0 %v1993
    %2056 = vmatpush.bf16.msra.mxu0 %v1992
    %2057 = vmatpush.bf16.msra.mxu0 %v1991
    %2058 = vmatpush.bf16.msra.mxu0 %v1990
    %2059 = vmatpush.bf16.msra.mxu0 %v1989
    %2060 = vmatpush.bf16.msra.mxu0 %v1988
    %2061 = vmatpush.bf16.msra.mxu0 %v1987
    %2062 = vmatpush.bf16.msra.mxu0 %v1986
    %2063 = vmatmul.bf16.gmra.mxu0 %v1779
    %v2064 = vpop.f32.mrf.mxu0
    %v2065 = vadd.f32 %v2052, %v2064
    %v2066 = vpop.f32.mrf.mxu0
    %2067 = vdwg.mxu0
    %2068 = vmatpush.bf16.msra.mxu0 %v2001
    %2069 = vmatpush.bf16.msra.mxu0 %v2000
    %2070 = vmatpush.bf16.msra.mxu0 %v1999
    %2071 = vmatpush.bf16.msra.mxu0 %v1998
    %2072 = vmatpush.bf16.msra.mxu0 %v1997
    %2073 = vmatpush.bf16.msra.mxu0 %v1996
    %2074 = vmatpush.bf16.msra.mxu0 %v1995
    %2075 = vmatpush.bf16.msra.mxu0 %v1994
    %2076 = vmatmul.bf16.gmra.mxu0 %v1780
    %v2077 = vpop.f32.mrf.mxu0
    %v2078 = vadd.f32 %v2065, %v2077
    %v2079 = vpop.f32.mrf.mxu0
    %2080 = vdwg.mxu0
    %2081 = vmatpush.bf16.msra.mxu0 %v2009
    %2082 = vmatpush.bf16.msra.mxu0 %v2008
    %2083 = vmatpush.bf16.msra.mxu0 %v2007
    %2084 = vmatpush.bf16.msra.mxu0 %v2006
    %2085 = vmatpush.bf16.msra.mxu0 %v2005
    %2086 = vmatpush.bf16.msra.mxu0 %v2004
    %2087 = vmatpush.bf16.msra.mxu0 %v2003
    %2088 = vmatpush.bf16.msra.mxu0 %v2002
    %2089 = vmatmul.bf16.gmra.mxu0 %v1781
    %v2090 = vpop.f32.mrf.mxu0
    %v2091 = vadd.f32 %v2078, %v2090
    %v2092 = vpop.f32.mrf.mxu0
    %2093 = vdwg.mxu0
    %v2094 = vmax.f32 %v2091, 0.0
    %v2095 = vpack.c.bf16 %v2094, %v2094
    %v2096 = vld [vmem:[%s5] sm:$0xf]
    %v2097 = vld [vmem:[%s5 + $0x4] sm:$0xf]
    %v2098 = vld [vmem:[%s5 + $0x8] sm:$0xf]
    %v2099 = vld [vmem:[%s5 + $0xc] sm:$0xf]
    %v2100 = vld [vmem:[%s5 + $0x10] sm:$0xf]
    %v2101 = vld [vmem:[%s5 + $0x14] sm:$0xf]
    %v2102 = vld [vmem:[%s5 + $0x18] sm:$0xf]
    %v2103 = vld [vmem:[%s5 + $0x1c] sm:$0xf]
    %v2104 = vld [vmem:[%s5 + $0x20] sm:$0xf]
    %v2105 = vld [vmem:[%s5 + $0x24] sm:$0xf]
    %v2106 = vld [vmem:[%s5 + $0x28] sm:$0xf]
    %v2107 = vld [vmem:[%s5 + $0x2c] sm:$0xf]
    %v2108 = vld [vmem:[%s5 + $0x30] sm:$0xf]
    %v2109 = vld [vmem:[%s5 + $0x34] sm:$0xf]
    %v2110 = vld [vmem:[%s5 + $0x38] sm:$0xf]
    %v2111 = vld [vmem:[%s5 + $0x3c] sm:$0xf]
    %v2112 = vld [vmem:[%s6] sm:$0x1]
    %v2114 = vperm.slane %v2112, 0
    %v2132 = vunpack.c.l.b16 %v2096
    %v2133 = vunpack.c.l.b16 %v2097
    %v2134 = vunpack.c.l.b16 %v2098
    %v2135 = vunpack.c.l.b16 %v2099
    %v2136 = vunpack.c.l.b16 %v2100
    %v2137 = vunpack.c.l.b16 %v2101
    %v2138 = vunpack.c.l.b16 %v2102
    %v2139 = vunpack.c.l.b16 %v2103
    %v2140 = vunpack.c.l.b16 %v2104
    %v2141 = vunpack.c.l.b16 %v2105
    %v2142 = vunpack.c.l.b16 %v2106
    %v2143 = vunpack.c.l.b16 %v2107
    %v2144 = vunpack.c.l.b16 %v2108
    %v2145 = vunpack.c.l.b16 %v2109
    %v2146 = vunpack.c.l.b16 %v2110
    %v2147 = vunpack.c.l.b16 %v2111
    %v2148 = vpack.c.b16 %v2133, %v2132
    %v2149 = vpack.c.b16 %v2135, %v2134
    %v2150 = vpack.c.b16 %v2137, %v2136
    %v2151 = vpack.c.b16 %v2139, %v2138
    %v2152 = vpack.c.b16 %v2141, %v2140
    %v2153 = vpack.c.b16 %v2143, %v2142
    %v2154 = vpack.c.b16 %v2145, %v2144
    %v2155 = vpack.c.b16 %v2147, %v2146
    %2164 = vmatpush.bf16.msra.mxu0 %v2155
    %2165 = vmatpush.bf16.msra.mxu0 %v2154
    %2166 = vmatpush.bf16.msra.mxu0 %v2153
    %2167 = vmatpush.bf16.msra.mxu0 %v2152
    %2168 = vmatpush.bf16.msra.mxu0 %v2151
    %2169 = vmatpush.bf16.msra.mxu0 %v2150
    %2170 = vmatpush.bf16.msra.mxu0 %v2149
    %2171 = vmatpush.bf16.msra.mxu0 %v2148
    %2172 = vmatmul.bf16.gmra.mxu0 %v2095
    %v2173 = vpop.f32.mrf.mxu0
    %v2174 = vadd.f32 %v2114, %v2173
    %v2175 = vpop.f32.mrf.mxu0
    %2176 = vdwg.mxu0
    %v2177 = vmax.f32 %v2174, 0.0
    %2178 = vst [vmem:[#allocation2] sm:$0xff] %v2177
    // Predicated region
    $region30: #{encoder_forward.1} parent=1 // pred_check
      _
    $region31: #{encoder_forward.1} parent=1 // pred_check_branch
      %2180 = sbr.rel (0) target = $region33
    $region32: #{encoder_forward.1} parent=1 // pred_region
      %2182 = vsyncadd [#allocation3], 0
      %s2184 = sshll.u32 [#allocation2], 4
      %s2185 = int_to_ptr.vmem [resolvable:$true] %s2184
      %s2186 = sshll.u32 %s7, 4
      %s2187 = int_to_ptr.hbm [resolvable:$true] %s2186
      %2189 = dma.vmem_to_hbm [thread:$0]  %s2185, 128, %s2187, [#allocation3]
    $region33: #{encoder_forward.1} parent=1 // pred_fallthru
      _
    // Predicated region
    $region34: #{encoder_forward.1} parent=1 // pred_check
      _
    $region35: #{encoder_forward.1} parent=1 // pred_check_branch
      %2191 = sbr.rel (0) target = $region37
    $region36: #{encoder_forward.1} parent=1 // pred_region
      %2193 = dma.done [#allocation3], 128
    $region37: #{encoder_forward.1} parent=1 // pred_fallthru
      _
    %2194 = vsyncpa [#allocation3], 1

</llo_original>
